<compile_context>
chip_gen: v6e
topology: v6e:2x2x1
jax: 0.10.0
libtpu: 0.0.40
codegen_flags: <defaults>
</compile_context>

<pallas_src>
import jax
import jax.numpy as jnp
from jax.experimental import pallas as pl
from jax.experimental.pallas import tpu as pltpu


def _round_up(x, m):
    return ((x + m - 1) // m) * m


def _lm_head_rep_kernel(x_ref, w1_ref, b1_ref, w2_ref, b2_ref, o_ref, h_ref):
    # x_ref : (tm, in_dim)     f32 row tile (cast to bf16 in-kernel)
    # w1_ref: (in_dim, hidden) bf16, full fc1 weight (in x out layout), resident
    # b1_ref: (1, hidden)      f32
    # w2_ref: (hidden, tn)     bf16 column tile of fc2 weight (streamed)
    # b2_ref: (1, tn)          f32
    # o_ref : (tm, tn)         output tile (input dtype)
    # h_ref : (tm, hidden)     bf16 VMEM scratch holding the fc1 activation

    # j is the inner ("arbitrary") grid axis: for each row tile we hit j == 0
    # first, compute h once, and reuse it for all output-column tiles.
    @pl.when(pl.program_id(1) == 0)
    def _():
        x = x_ref[...].astype(jnp.bfloat16)
        h = jnp.dot(x, w1_ref[...], preferred_element_type=jnp.float32)
        h = h + b1_ref[...]
        # F.leaky_relu default negative_slope = 0.01 (< 1, so max is equivalent)
        h = jnp.maximum(h, 0.01 * h)
        h_ref[...] = h.astype(h_ref.dtype)

    out = jnp.dot(h_ref[...], w2_ref[...], preferred_element_type=jnp.float32)
    out = out + b2_ref[...]
    o_ref[...] = out.astype(o_ref.dtype)


def prepare_params(w1, b1, w2, b2, *, tn=1024):
    """One-time parameter prep (do NOT call per forward).

    Casts weights to bf16 and pads the vocab dim to a multiple of the column
    tile so every output tile is full-width. Weights stored as (in, out).
    """
    in_dim, hidden = w1.shape
    out_dim = w2.shape[1]
    tn_eff = min(tn, _round_up(out_dim, 128))
    out_pad = _round_up(out_dim, tn_eff)

    w1_bf = w1.astype(jnp.bfloat16)
    b1_2d = b1.reshape(1, hidden).astype(jnp.float32)
    w2_bf = w2.astype(jnp.bfloat16)
    b2_2d = b2.reshape(1, out_dim).astype(jnp.float32)
    if out_pad != out_dim:
        w2_bf = jnp.pad(w2_bf, ((0, 0), (0, out_pad - out_dim)))
        b2_2d = jnp.pad(b2_2d, ((0, 0), (0, out_pad - out_dim)))

    return {
        "w1": w1_bf, "b1": b1_2d, "w2": w2_bf, "b2": b2_2d,
        "out_dim": out_dim, "tn": tn_eff,
    }


def lm_head_rep_forward(z, params, *, tm=512):
    """z: (B, S, in_dim) -> (B, S, out_dim). `params` from prepare_params()."""
    B, S, in_dim = z.shape
    w1, b1, w2, b2 = params["w1"], params["b1"], params["w2"], params["b2"]
    out_dim = params["out_dim"]
    tn_eff = params["tn"]
    hidden = w1.shape[1]
    out_pad = w2.shape[1]
    M = B * S

    # x stays f32 and unpadded in HBM; Pallas clips the edge row tile and the
    # kernel casts to bf16. Row tile: clamp to the problem, keep sublane=8
    # alignment, and keep >= 2 row tiles when possible so v7x's second
    # TensorCore gets work via the "parallel" i axis.
    x2d = z.reshape(M, in_dim)
    tm_eff = min(tm, _round_up(M, 8))
    if M > 8 and pl.cdiv(M, tm_eff) < 2:
        tm_eff = _round_up(pl.cdiv(M, 2), 8)

    m_tiles = pl.cdiv(M, tm_eff)
    n_tiles = out_pad // tn_eff            # exact: out_pad padded to tn_eff
    grid = (m_tiles, n_tiles)
    m_pad = m_tiles * tm_eff

    flops = 2 * m_pad * in_dim * hidden + 2 * m_pad * hidden * out_pad
    bytes_accessed = (
        M * in_dim * z.dtype.itemsize                      # x read once
        + w1.size * w1.dtype.itemsize + b1.size * b1.dtype.itemsize  # resident
        + m_tiles * (w2.size * w2.dtype.itemsize           # W2/b2 re-streamed
                     + b2.size * b2.dtype.itemsize)        #   once per row tile
        + m_pad * out_pad * z.dtype.itemsize               # output write
    )

    out2d = pl.pallas_call(
        _lm_head_rep_kernel,
        out_shape=jax.ShapeDtypeStruct((m_pad, out_pad), z.dtype),
        grid=grid,
        in_specs=[
            pl.BlockSpec((tm_eff, in_dim), lambda i, j: (i, 0)),       # x row tile
            pl.BlockSpec((in_dim, hidden), lambda i, j: (0, 0),        # W1 resident:
                         pipeline_mode=pl.Buffered(1)),                #  no double buffer
            pl.BlockSpec((1, hidden), lambda i, j: (0, 0),             # b1 resident
                         pipeline_mode=pl.Buffered(1)),
            pl.BlockSpec((hidden, tn_eff), lambda i, j: (0, j)),       # W2 col tile (streamed)
            pl.BlockSpec((1, tn_eff), lambda i, j: (0, j)),            # b2 tile
        ],
        out_specs=pl.BlockSpec((tm_eff, tn_eff), lambda i, j: (i, j)),
        scratch_shapes=[pltpu.VMEM((tm_eff, hidden), jnp.bfloat16)],   # cached fc1 act
        compiler_params=pltpu.CompilerParams(
            # i: independent row tiles (megacore-shardable); j: carries the
            # h scratch across column tiles, so it MUST stay sequential.
            dimension_semantics=("parallel", "arbitrary"),
            # Explicit limit: v5e scoped default is only 16 MiB; 48 MiB still
            # leaves headroom under v7x's 64 MiB physical VMEM.
            vmem_limit_bytes=48 * 1024 * 1024,
        ),
        cost_estimate=pl.CostEstimate(
            flops=flops, transcendentals=0, bytes_accessed=bytes_accessed
        ),
    )(x2d, w1, b1, w2, b2)

    return out2d[:M, :out_dim].reshape(B, S, out_dim)


def init_params(key, in_dim, hidden, out_dim, dtype=jnp.float32):
    """Deterministic init mimicking nn.Linear's uniform(-1/sqrt(fan_in), ...)."""
    k1, k2, k3, k4 = jax.random.split(key, 4)
    bound1 = 1.0 / (in_dim ** 0.5)
    bound2 = 1.0 / (hidden ** 0.5)
    # stored as (in, out) so the kernel can do x @ W directly
    w1 = jax.random.uniform(k1, (in_dim, hidden), dtype, -bound1, bound1)
    b1 = jax.random.uniform(k2, (hidden,), dtype, -bound1, bound1)
    w2 = jax.random.uniform(k3, (hidden, out_dim), dtype, -bound2, bound2)
    b2 = jax.random.uniform(k4, (out_dim,), dtype, -bound2, bound2)
    return w1, b1, w2, b2


if __name__ == "__main__":
    # Small shapes consistent with the module (in -> hidden MLP -> vocab),
    # scaled down. out_dim=1000 (not a multiple of 128) exercises the vocab
    # padding path, and M=256 with tm=512 exercises the grid[0]>=2 clamp and
    # both grid axes (2 row tiles x 2 vocab tiles).
    B, S = 2, 128
    in_dim, hidden, out_dim = 128, 256, 1000

    key = jax.random.PRNGKey(0)
    kz, kp = jax.random.split(key)
    z = jax.random.normal(kz, (B, S, in_dim), jnp.float32)
    w1, b1, w2, b2 = init_params(kp, in_dim, hidden, out_dim)

    # One-time prep (bf16 cast + vocab pad) -- outside the hot forward path.
    params = prepare_params(w1, b1, w2, b2, tn=512)

    out = lm_head_rep_forward(z, params, tm=512)
    out = jax.block_until_ready(out)

    # Reference in plain JAX following the same bf16-weight / f32-accumulate
    # compute path as the kernel (module semantics: fc1 -> leaky_relu -> fc2).
    x_bf = z.reshape(-1, in_dim).astype(jnp.bfloat16)
    h_ref = jnp.dot(x_bf, w1.astype(jnp.bfloat16),
                    preferred_element_type=jnp.float32) + b1
    h_ref = jnp.where(h_ref >= 0, h_ref, 0.01 * h_ref)
    ref = (jnp.dot(h_ref.astype(jnp.bfloat16), w2.astype(jnp.bfloat16),
                   preferred_element_type=jnp.float32) + b2)
    ref = ref.reshape(B, S, out_dim).astype(out.dtype)

    assert out.shape == (B, S, out_dim)
    assert jnp.allclose(out, ref, atol=1e-2, rtol=1e-2), (
        float(jnp.max(jnp.abs(out - ref)))
    )

    print("KERNEL_OK")
</pallas_src>

<mosaic_0001>
module attributes {stable_mosaic.version = 11 : i64} {
  func.func @_lm_head_rep_kernel(%arg0: i32, %arg1: i32, %arg2: memref<128x128xf32, #tpu.memory_space<vmem>>, %arg3: memref<128x256xbf16, #tpu.memory_space<vmem>>, %arg4: memref<1x256xf32, #tpu.memory_space<vmem>>, %arg5: memref<256x512xbf16, #tpu.memory_space<vmem>>, %arg6: memref<1x512xf32, #tpu.memory_space<vmem>>, %arg7: memref<128x512xf32, #tpu.memory_space<vmem>>, %arg8: memref<128x256xbf16, #tpu.memory_space<vmem>>) attributes {dimension_semantics = [#tpu.dimension_semantics<parallel>, #tpu.dimension_semantics<arbitrary>], iteration_bounds = array<i64: 2, 2>, scalar_prefetch = 0 : i64, scratch_operands = 1 : i64, tpu.core_type = #tpu.core_type<tc>, window_params = [{transform_indices = @transform_0, window_bounds = array<i64: 128, 128>}, {pipeline_mode = #tpu.pipeline_mode<synchronous>, transform_indices = @transform_1, window_bounds = array<i64: 128, 256>}, {pipeline_mode = #tpu.pipeline_mode<synchronous>, transform_indices = @transform_2, window_bounds = array<i64: 1, 256>}, {transform_indices = @transform_3, window_bounds = array<i64: 256, 512>}, {transform_indices = @transform_4, window_bounds = array<i64: 1, 512>}, {transform_indices = @transform_5, window_bounds = array<i64: 128, 512>}]} {
    %c0_i32 = arith.constant 0 : i32
    %0 = arith.cmpi eq, %arg1, %c0_i32 : i32
    %1 = arith.extui %0 : i1 to i32
    %c0_i32_0 = arith.constant 0 : i32
    %2 = arith.cmpi ne, %1, %c0_i32_0 : i32
    scf.if %2 {
      %c0_8 = arith.constant 0 : index
      %c0_9 = arith.constant 0 : index
      %10 = vector.load %arg2[%c0_8, %c0_9] : memref<128x128xf32, #tpu.memory_space<vmem>>, vector<128x128xf32>
      %11 = arith.truncf %10 : vector<128x128xf32> to vector<128x128xbf16>
      %c0_10 = arith.constant 0 : index
      %c0_11 = arith.constant 0 : index
      %12 = vector.load %arg3[%c0_10, %c0_11] : memref<128x256xbf16, #tpu.memory_space<vmem>>, vector<128x256xbf16>
      %cst_12 = arith.constant dense<0.000000e+00> : vector<128x256xf32>
      %13 = tpu.matmul %11, %12, %cst_12 {dimension_numbers = #tpu.dot_dimension_numbers<[1], [0], [0], [1], [0, 0, 1, 1], [], []>} : vector<128x128xbf16>, vector<128x256xbf16>, vector<128x256xf32> -> vector<128x256xf32>
      %c0_13 = arith.constant 0 : index
      %c0_14 = arith.constant 0 : index
      %14 = vector.load %arg4[%c0_13, %c0_14] : memref<1x256xf32, #tpu.memory_space<vmem>>, vector<1x256xf32>
      %15 = vector.broadcast %14 : vector<1x256xf32> to vector<128x256xf32>
      %16 = arith.addf %13, %15 : vector<128x256xf32>
      %cst_15 = arith.constant 0.00999999977 : f32
      %17 = vector.broadcast %cst_15 : f32 to vector<128x256xf32>
      %18 = arith.mulf %17, %16 : vector<128x256xf32>
      %19 = arith.maximumf %16, %18 : vector<128x256xf32>
      %20 = arith.truncf %19 : vector<128x256xf32> to vector<128x256xbf16>
      %c0_16 = arith.constant 0 : index
      %c0_17 = arith.constant 0 : index
      %21 = vector.load %arg8[%c0_16, %c0_17] : memref<128x256xbf16, #tpu.memory_space<vmem>>, vector<128x256xbf16>
      tpu.vector_store %arg8[%c0_16, %c0_17], %20 {strides = array<i32>} : memref<128x256xbf16, #tpu.memory_space<vmem>>, vector<128x256xbf16>,
    } else {
    }
    %c0 = arith.constant 0 : index
    %c0_1 = arith.constant 0 : index
    %3 = vector.load %arg8[%c0, %c0_1] : memref<128x256xbf16, #tpu.memory_space<vmem>>, vector<128x256xbf16>
    %c0_2 = arith.constant 0 : index
    %c0_3 = arith.constant 0 : index
    %4 = vector.load %arg5[%c0_2, %c0_3] : memref<256x512xbf16, #tpu.memory_space<vmem>>, vector<256x512xbf16>
    %cst = arith.constant dense<0.000000e+00> : vector<128x512xf32>
    %5 = tpu.matmul %3, %4, %cst {dimension_numbers = #tpu.dot_dimension_numbers<[1], [0], [0], [1], [0, 0, 1, 1], [], []>} : vector<128x256xbf16>, vector<256x512xbf16>, vector<128x512xf32> -> vector<128x512xf32>
    %c0_4 = arith.constant 0 : index
    %c0_5 = arith.constant 0 : index
    %6 = vector.load %arg6[%c0_4, %c0_5] : memref<1x512xf32, #tpu.memory_space<vmem>>, vector<1x512xf32>
    %7 = vector.broadcast %6 : vector<1x512xf32> to vector<128x512xf32>
    %8 = arith.addf %5, %7 : vector<128x512xf32>
    %c0_6 = arith.constant 0 : index
    %c0_7 = arith.constant 0 : index
    %9 = vector.load %arg7[%c0_6, %c0_7] : memref<128x512xf32, #tpu.memory_space<vmem>>, vector<128x512xf32>
    tpu.vector_store %arg7[%c0_6, %c0_7], %8 {strides = array<i32>} : memref<128x512xf32, #tpu.memory_space<vmem>>, vector<128x512xf32>,
    return
  }
  func.func @transform_0(%arg0: i32, %arg1: i32) -> (i32, i32) {
    %c0_i32 = arith.constant 0 : i32
    %c0_i32_0 = arith.constant 0 : i32
    return %arg0, %c0_i32 : i32, i32
  }
  func.func @transform_1(%arg0: i32, %arg1: i32) -> (i32, i32) {
    %c0_i32 = arith.constant 0 : i32
    %c0_i32_0 = arith.constant 0 : i32
    %c0_i32_1 = arith.constant 0 : i32
    return %c0_i32, %c0_i32_0 : i32, i32
  }
  func.func @transform_2(%arg0: i32, %arg1: i32) -> (i32, i32) {
    %c0_i32 = arith.constant 0 : i32
    %c0_i32_0 = arith.constant 0 : i32
    %c0_i32_1 = arith.constant 0 : i32
    return %c0_i32, %c0_i32_0 : i32, i32
  }
  func.func @transform_3(%arg0: i32, %arg1: i32) -> (i32, i32) {
    %c0_i32 = arith.constant 0 : i32
    %c0_i32_0 = arith.constant 0 : i32
    return %c0_i32, %arg1 : i32, i32
  }
  func.func @transform_4(%arg0: i32, %arg1: i32) -> (i32, i32) {
    %c0_i32 = arith.constant 0 : i32
    %c0_i32_0 = arith.constant 0 : i32
    return %c0_i32, %arg1 : i32, i32
  }
  func.func @transform_5(%arg0: i32, %arg1: i32) -> (i32, i32) {
    %c0_i32 = arith.constant 0 : i32
    return %arg0, %arg1 : i32, i32
  }
}

</mosaic_0001>

<llo_original>
// kernel: tpu_custom_call.1
$region0: #{tpu_custom_call.1}
  #allocation0 [shape = 'u32[]', space=smem, size = 0x4, offset = 0x4, fixed_abs, tag = 'smem constant byte address 0x4 - core index']
  #allocation1 [shape = 'u32[144,128]{1,0:T(1,128)}', space=vmem, size = 0x12000, scoped, tag = 'internal scratch']
  #allocation2 [shape = 'bf16[128,256]{1,0:T(8,128)(2,1)}', space=vmem, size = 0x10000, scoped, tag = 'scratch operand']
  %s0 = inlined_call_operand.hbm [shape: f32[256,128], index: 0, kind: input, shape index: {}]
  %s1 = inlined_call_operand.hbm [shape: bf16[128,256], index: 1, kind: input, shape index: {}]
  %s2 = inlined_call_operand.vmem [shape: f32[1,256], index: 2, kind: input, shape index: {}]
  %s3 = inlined_call_operand.hbm [shape: bf16[256,1024], index: 3, kind: input, shape index: {}]
  %s4 = inlined_call_operand.hbm [shape: f32[1,1024], index: 4, kind: input, shape index: {}]
  %s5 = inlined_call_operand.hbm [shape: f32[256,1024], index: 5, kind: output, shape index: {}]
  %s6 = sld [smem:[#allocation0]]
  $region73: #{tpu_custom_call.1} parent=0
    _
  %s8 = ssub.s32 1, %s6
  %s9 = scalar_select 0, %s8, %s6
  $region1: #{tpu_custom_call.1} parent=0
    #allocation3 [shape = 'u8[131072]{0}', space=vmem, size = 0x20000, scoped, tag = 'input window, operand 0']
    #allocation4 [shape = 's32[2]{0}', space=sflag, size = 0x8, scoped, tag = 'scoped memory for tpu_custom_call.1']
    #allocation5 [shape = 's32[2]{0}', space=sflag, size = 0x8, scoped, tag = 'scoped memory for tpu_custom_call.1']
    #allocation6 [shape = 'u8[65536]{0}', space=vmem, size = 0x10000, scoped, tag = 'input window, operand 1, single buffered']
    #allocation7 [shape = 's32[1]{0}', space=sflag, size = 0x4, scoped, tag = 'scoped memory for tpu_custom_call.1']
    #allocation8 [shape = 'u8[524288]{0}', space=vmem, size = 0x80000, scoped, tag = 'input window, operand 3']
    #allocation9 [shape = 'u8[4096]{0}', space=vmem, size = 0x1000, scoped, tag = 'input window, operand 4']
    #allocation10 [shape = 'u8[524288]{0}', space=vmem, size = 0x80000, scoped, tag = 'output window, operand 0']
    %10 = vsyncpa [#allocation4], 0
    %s11 = scalar_lea.sflag [#allocation4], 1
    %12 = vsyncpa %s11, 0
    %13 = vsyncpa [#allocation7], 0
    %14 = vsyncpa [#allocation5], 0
    %s15 = scalar_lea.sflag [#allocation5], 1
    %16 = vsyncpa %s15, 0
    loop: start=0, step=1, limit=6
    $region2: #{tpu_custom_call.1} parent=1 // loop_pre_header
      _
    $region3: #{tpu_custom_call.1} parent=1 // loop_header
      %s18 = sphi 0, %s22
      %p19 = scmp.ge.s32.totalorder %s18, 6
      %s25 = sphi 0, %s37
      %s26 = sphi 0, %s33
      %s27 = sphi 0, %s25
      %s28 = sphi 0, %s26
      %s29 = sphi 0, %s27
      %s30 = sphi 0, %s28
      %s40 = sphi 0, %s42
      %s43 = sphi 0, %s40
      %s44 = sphi 0, %s43
      %s60 = sphi 0, %s44
      %s64 = sphi 0, %s64
      %s66 = sphi 0, %s64
      %s67 = sphi 0, %s66
      %s81 = sphi 0, %s67
      %s85 = sphi 0, %s85
      %s87 = sphi 0, %s85
      %s88 = sphi 0, %s87
      %s102 = sphi 0, %s88
      %s108 = sphi 0, %s110
      %s111 = sphi 0, %s108
      %s112 = sphi 0, %s111
      %s128 = sphi 0, %s112
      %s134 = sphi 0, %s136
      %s137 = sphi 0, %s134
      %s138 = sphi 0, %s137
      %s154 = sphi 0, %s138
      %s162 = sphi 0, %s164
      %s165 = sphi 0, %s162
      %s166 = sphi 0, %s165
      %s182 = sphi 0, %s166
    $region4: #{tpu_custom_call.1} parent=1 // loop_header_branch
      %21 = sbr.rel (%p19) target = $region8
    $region5: #{tpu_custom_call.1} parent=1 // loop_body
      %s23 = ssub.s32 %s18, 1
      %s24 = ssub.s32 %s18, 2
      %s31 = sadd.s32 1, %s26
      %p32 = scmp.ge.s32.totalorder %s31, 2
      %s33 = scalar_select %p32, 0, %s31
      %s34 = sadd.s32 1, %s25
      %s35 = scalar_select %p32, %s34, %s25
      %p36 = scmp.ge.s32.totalorder %s35, 2
      %s37 = scalar_select %p36, 0, %s35
      %s38 = ssub.s32 %s25, %s37
      %p39 = scmp.eq.s32.totalorder %s38, 0
      %s41 = sadd.s32 %s40, 1
      %s42 = scalar_select %p39, %s40, %s41
      %p45 = pneg %p39
      %p46 = scmp.eq.s32.totalorder %s18, 3
      %p47 = por %p45, %p46
      %p48 = scmp.ne.s32.totalorder %s40, %s43
      %p49 = scmp.eq.s32.totalorder %s18, 0
      %p50 = por %p48, %p49
      %p51 = scmp.ne.s32.totalorder %s40, %s43
      %p52 = scmp.eq.s32.totalorder %s23, 3
      %p53 = por %p51, %p52
      %p54 = scmp.ne.s32.totalorder %s43, %s44
      %p55 = scmp.eq.s32.totalorder %s23, 0
      %p56 = por %p54, %p55
      %p57 = scmp.ne.s32.totalorder %s43, %s44
      %p58 = scmp.eq.s32.totalorder %s24, 3
      %p59 = por %p57, %p58
      %p61 = scmp.ne.s32.totalorder %s44, %s60
      %p62 = scmp.eq.s32.totalorder %s24, 0
      %p63 = por %p61, %p62
      %s65 = sadd.s32 %s64, 1
      %p68 = scmp.eq.s32.totalorder %s18, 3
      %p69 = scmp.ne.s32.totalorder %s64, %s66
      %p70 = scmp.eq.s32.totalorder %s18, 0
      %p71 = por %p69, %p70
      %p72 = scmp.ne.s32.totalorder %s64, %s66
      %p73 = scmp.eq.s32.totalorder %s23, 3
      %p74 = por %p72, %p73
      %p75 = scmp.ne.s32.totalorder %s66, %s67
      %p76 = scmp.eq.s32.totalorder %s23, 0
      %p77 = por %p75, %p76
      %p78 = scmp.ne.s32.totalorder %s66, %s67
      %p79 = scmp.eq.s32.totalorder %s24, 3
      %p80 = por %p78, %p79
      %p82 = scmp.ne.s32.totalorder %s67, %s81
      %p83 = scmp.eq.s32.totalorder %s24, 0
      %p84 = por %p82, %p83
      %s86 = sadd.s32 %s85, 1
      %p89 = scmp.eq.s32.totalorder %s18, 3
      %p90 = scmp.ne.s32.totalorder %s85, %s87
      %p91 = scmp.eq.s32.totalorder %s18, 0
      %p92 = por %p90, %p91
      %p93 = scmp.ne.s32.totalorder %s85, %s87
      %p94 = scmp.eq.s32.totalorder %s23, 3
      %p95 = por %p93, %p94
      %p96 = scmp.ne.s32.totalorder %s87, %s88
      %p97 = scmp.eq.s32.totalorder %s23, 0
      %p98 = por %p96, %p97
      %p99 = scmp.ne.s32.totalorder %s87, %s88
      %p100 = scmp.eq.s32.totalorder %s24, 3
      %p101 = por %p99, %p100
      %p103 = scmp.ne.s32.totalorder %s88, %s102
      %p104 = scmp.eq.s32.totalorder %s24, 0
      %p105 = por %p103, %p104
      %s106 = ssub.s32 %s26, %s33
      %p107 = scmp.eq.s32.totalorder %s106, 0
      %s109 = sadd.s32 %s108, 1
      %s110 = scalar_select %p107, %s108, %s109
      %p113 = pneg %p107
      %p114 = scmp.eq.s32.totalorder %s18, 3
      %p115 = por %p113, %p114
      %p116 = scmp.ne.s32.totalorder %s108, %s111
      %p117 = scmp.eq.s32.totalorder %s18, 0
      %p118 = por %p116, %p117
      %p119 = scmp.ne.s32.totalorder %s108, %s111
      %p120 = scmp.eq.s32.totalorder %s23, 3
      %p121 = por %p119, %p120
      %p122 = scmp.ne.s32.totalorder %s111, %s112
      %p123 = scmp.eq.s32.totalorder %s23, 0
      %p124 = por %p122, %p123
      %p125 = scmp.ne.s32.totalorder %s111, %s112
      %p126 = scmp.eq.s32.totalorder %s24, 3
      %p127 = por %p125, %p126
      %p129 = scmp.ne.s32.totalorder %s112, %s128
      %p130 = scmp.eq.s32.totalorder %s24, 0
      %p131 = por %p129, %p130
      %s132 = ssub.s32 %s26, %s33
      %p133 = scmp.eq.s32.totalorder %s132, 0
      %s135 = sadd.s32 %s134, 1
      %s136 = scalar_select %p133, %s134, %s135
      %p139 = pneg %p133
      %p140 = scmp.eq.s32.totalorder %s18, 3
      %p141 = por %p139, %p140
      %p142 = scmp.ne.s32.totalorder %s134, %s137
      %p143 = scmp.eq.s32.totalorder %s18, 0
      %p144 = por %p142, %p143
      %p145 = scmp.ne.s32.totalorder %s134, %s137
      %p146 = scmp.eq.s32.totalorder %s23, 3
      %p147 = por %p145, %p146
      %p148 = scmp.ne.s32.totalorder %s137, %s138
      %p149 = scmp.eq.s32.totalorder %s23, 0
      %p150 = por %p148, %p149
      %p151 = scmp.ne.s32.totalorder %s137, %s138
      %p152 = scmp.eq.s32.totalorder %s24, 3
      %p153 = por %p151, %p152
      %p155 = scmp.ne.s32.totalorder %s138, %s154
      %p156 = scmp.eq.s32.totalorder %s24, 0
      %p157 = por %p155, %p156
      %s158 = ssub.s32 %s25, %s37
      %s159 = ssub.s32 %s26, %s33
      %s160 = sor.u32 %s158, %s159
      %p161 = scmp.eq.s32.totalorder %s160, 0
      %s163 = sadd.s32 %s162, 1
      %s164 = scalar_select %p161, %s162, %s163
      %p167 = pneg %p161
      %p168 = scmp.eq.s32.totalorder %s18, 3
      %p169 = por %p167, %p168
      %p170 = scmp.ne.s32.totalorder %s162, %s165
      %p171 = scmp.eq.s32.totalorder %s18, 0
      %p172 = por %p170, %p171
      %p173 = scmp.ne.s32.totalorder %s162, %s165
      %p174 = scmp.eq.s32.totalorder %s23, 3
      %p175 = por %p173, %p174
      %p176 = scmp.ne.s32.totalorder %s165, %s166
      %p177 = scmp.eq.s32.totalorder %s23, 0
      %p178 = por %p176, %p177
      %p179 = scmp.ne.s32.totalorder %s165, %s166
      %p180 = scmp.eq.s32.totalorder %s24, 3
      %p181 = por %p179, %p180
      %p183 = scmp.ne.s32.totalorder %s166, %s182
      %p184 = scmp.eq.s32.totalorder %s24, 0
      %p185 = por %p183, %p184
      %p186 = scmp.le.s32.totalorder 1, %s18
      %p187 = scmp.lt.s32.totalorder %s18, 5
      %p188 = pnand %p186, %p187
      %p189 = pneg %p188
      // Predicated region
      $region9: #{tpu_custom_call.1} parent=5 // pred_check
        _
      $region10: #{tpu_custom_call.1} parent=5 // pred_check_branch
        %191 = sbr.rel (%p188) target = $region12
      $region11: #{tpu_custom_call.1} parent=5 // pred_region
        %s192 = ssub.s32 %s18, 1
        // Predicated region
        $region13: #{tpu_custom_call.1} parent=11 // pred_check
          %p193 = pneg %p77
        $region14: #{tpu_custom_call.1} parent=11 // pred_check_branch
          %195 = sbr.rel (%p193) target = $region16
        $region15: #{tpu_custom_call.1} parent=11 // pred_region
          %s197 = ssub.s32 2048, 2048
          %198 = vsyncadd [#allocation7], %s197
          %s199 = sshll.u32 [#allocation6], 4
          %s200 = int_to_ptr.vmem [resolvable:$true] %s199
          %205 = dma.hbm_to_vmem [thread:$0]  %s1, 2048, %s200, [#allocation7], 128, 128, 8
        $region16: #{tpu_custom_call.1} parent=11 // pred_fallthru
          _
        // Predicated region
        $region17: #{tpu_custom_call.1} parent=11 // pred_check
          %p206 = pneg %p98
        $region18: #{tpu_custom_call.1} parent=11 // pred_check_branch
          %208 = sbr.rel (%p206) target = $region20
        $region19: #{tpu_custom_call.1} parent=11 // pred_region
          _
        $region20: #{tpu_custom_call.1} parent=11 // pred_fallthru
          _
      $region12: #{tpu_custom_call.1} parent=5 // pred_fallthru
        _
      %p209 = scmp.lt.s32.totalorder %s18, 4
      // Predicated region
      $region21: #{tpu_custom_call.1} parent=5 // pred_check
        %p210 = pneg %p209
      $region22: #{tpu_custom_call.1} parent=5 // pred_check_branch
        %212 = sbr.rel (%p210) target = $region24
      $region23: #{tpu_custom_call.1} parent=5 // pred_region
        // Predicated region
        $region25: #{tpu_custom_call.1} parent=23 // pred_check
          %p213 = pneg %p50
        $region26: #{tpu_custom_call.1} parent=23 // pred_check_branch
          %215 = sbr.rel (%p213) target = $region28
        $region27: #{tpu_custom_call.1} parent=23 // pred_region
          %s216 = sand.u32 %s18, 1
          %s217 = scalar_lea.sflag [#allocation4], %s216
          %s218 = sand.u32 %s40, 1
          %s219 = smul.addr %s218, 128
          %s220 = scalar_lea.vmem [#allocation3], %s219
          %s221 = smul.u32 16, %s25
          %s223 = ssub.s32 2048, 2048
          %224 = vsyncadd %s217, %s223
          %s225 = smul.addr %s221, 128
          %s226 = scalar_lea.hbm %s0, %s225
          %s227 = sshll.u32 %s220, 4
          %s228 = int_to_ptr.vmem [resolvable:$true] %s227
          %233 = dma.hbm_to_vmem [thread:$0]  %s226, 2048, %s228, %s217, 128, 128, 8
        $region28: #{tpu_custom_call.1} parent=23 // pred_fallthru
          _
        // Predicated region
        $region29: #{tpu_custom_call.1} parent=23 // pred_check
          %p234 = pneg %p118
        $region30: #{tpu_custom_call.1} parent=23 // pred_check_branch
          %236 = sbr.rel (%p234) target = $region32
        $region31: #{tpu_custom_call.1} parent=23 // pred_region
          %s237 = sand.u32 %s18, 1
          %s238 = scalar_lea.sflag [#allocation4], %s237
          %s239 = sand.u32 %s108, 1
          %s240 = smul.addr %s239, 512
          %s241 = scalar_lea.vmem [#allocation8], %s240
          %s242 = smul.u32 4, %s26
          %s244 = ssub.s32 8192, 8192
          %245 = vsyncadd %s238, %s244
          %s246 = smul.addr %s242, 64
          %s247 = scalar_lea.hbm %s3, %s246
          %s248 = sshll.u32 %s241, 4
          %s249 = int_to_ptr.vmem [resolvable:$true] %s248
          %254 = dma.hbm_to_vmem [thread:$0]  %s247, 8192, %s249, %s238, 512, 256, 16
        $region32: #{tpu_custom_call.1} parent=23 // pred_fallthru
          _
        // Predicated region
        $region33: #{tpu_custom_call.1} parent=23 // pred_check
          %p255 = pneg %p144
        $region34: #{tpu_custom_call.1} parent=23 // pred_check_branch
          %257 = sbr.rel (%p255) target = $region36
        $region35: #{tpu_custom_call.1} parent=23 // pred_region
          %s258 = sand.u32 %s18, 1
          %s259 = scalar_lea.sflag [#allocation4], %s258
          %s260 = sand.u32 %s134, 1
          %s261 = smul.addr %s260, 4
          %s262 = scalar_lea.vmem [#allocation9], %s261
          %s263 = smul.u32 4, %s26
          %s265 = ssub.s32 64, 64
          %266 = vsyncadd %s259, %s265
          %s267 = smul.addr %s263, 16
          %s268 = scalar_lea.hbm %s4, %s267
          %s270 = sshll.u32 %s262, 4
          %s271 = int_to_ptr.vmem [resolvable:$true] %s270
          %273 = dma.hbm_to_vmem [thread:$0]  %s268, 64, %s271, %s259
        $region36: #{tpu_custom_call.1} parent=23 // pred_fallthru
          _
      $region24: #{tpu_custom_call.1} parent=5 // pred_fallthru
        _
      %p274 = scmp.le.s32.totalorder 1, %s18
      %p275 = scmp.lt.s32.totalorder %s18, 5
      %p276 = pnand %p274, %p275
      %p277 = pneg %p276
      // Predicated region
      $region37: #{tpu_custom_call.1} parent=5 // pred_check
        _
      $region38: #{tpu_custom_call.1} parent=5 // pred_check_branch
        %279 = sbr.rel (%p276) target = $region40
      $region39: #{tpu_custom_call.1} parent=5 // pred_region
        %s280 = ssub.s32 %s18, 1
        %s281 = sand.u32 %s23, 1
        %s282 = scalar_lea.sflag [#allocation4], %s281
        %s283 = sand.u32 %s43, 1
        %s284 = smul.addr %s283, 128
        %s285 = scalar_lea.vmem [#allocation3], %s284
        // Predicated region
        $region41: #{tpu_custom_call.1} parent=39 // pred_check
          %p286 = pneg %p56
        $region42: #{tpu_custom_call.1} parent=39 // pred_check_branch
          %288 = sbr.rel (%p286) target = $region44
        $region43: #{tpu_custom_call.1} parent=39 // pred_region
          %289 = dma.done %s282, 2048
        $region44: #{tpu_custom_call.1} parent=39 // pred_fallthru
          _
        // Predicated region
        $region45: #{tpu_custom_call.1} parent=39 // pred_check
          %p290 = pneg %p77
        $region46: #{tpu_custom_call.1} parent=39 // pred_check_branch
          %292 = sbr.rel (%p290) target = $region48
        $region47: #{tpu_custom_call.1} parent=39 // pred_region
          %293 = dma.done [#allocation7], 2048
        $region48: #{tpu_custom_call.1} parent=39 // pred_fallthru
          _
        %s294 = sand.u32 %s23, 1
        %s295 = scalar_lea.sflag [#allocation4], %s294
        %s296 = sand.u32 %s111, 1
        %s297 = smul.addr %s296, 512
        %s298 = scalar_lea.vmem [#allocation8], %s297
        // Predicated region
        $region49: #{tpu_custom_call.1} parent=39 // pred_check
          %p299 = pneg %p124
        $region50: #{tpu_custom_call.1} parent=39 // pred_check_branch
          %301 = sbr.rel (%p299) target = $region52
        $region51: #{tpu_custom_call.1} parent=39 // pred_region
          %302 = dma.done %s295, 8192
        $region52: #{tpu_custom_call.1} parent=39 // pred_fallthru
          _
        %s303 = sand.u32 %s23, 1
        %s304 = scalar_lea.sflag [#allocation4], %s303
        %s305 = sand.u32 %s137, 1
        %s306 = smul.addr %s305, 4
        %s307 = scalar_lea.vmem [#allocation9], %s306
        // Predicated region
        $region53: #{tpu_custom_call.1} parent=39 // pred_check
          %p308 = pneg %p150
        $region54: #{tpu_custom_call.1} parent=39 // pred_check_branch
          %310 = sbr.rel (%p308) target = $region56
        $region55: #{tpu_custom_call.1} parent=39 // pred_region
          %311 = dma.done %s304, 64
        $region56: #{tpu_custom_call.1} parent=39 // pred_fallthru
          _
        %s312 = sand.u32 %s23, 1
        %s313 = scalar_lea.sflag [#allocation4], %s312
        %s314 = sand.u32 %s43, 1
        %s315 = smul.addr %s314, 128
        %s316 = scalar_lea.vmem [#allocation3], %s315
        %p317 = pneg %p56
        %p318 = pneg %p53
        %p319 = pneg %p77
        %p320 = pneg %p74
        %p321 = pneg %p98
        %p322 = pneg %p95
        %s323 = sand.u32 %s23, 1
        %s324 = scalar_lea.sflag [#allocation4], %s323
        %s325 = sand.u32 %s111, 1
        %s326 = smul.addr %s325, 512
        %s327 = scalar_lea.vmem [#allocation8], %s326
        %p328 = pneg %p124
        %p329 = pneg %p121
        %s330 = sand.u32 %s23, 1
        %s331 = scalar_lea.sflag [#allocation4], %s330
        %s332 = sand.u32 %s137, 1
        %s333 = smul.addr %s332, 4
        %s334 = scalar_lea.vmem [#allocation9], %s333
        %p335 = pneg %p150
        %p336 = pneg %p147
        %p337 = pneg %p178
        %p338 = pneg %p175
        %s339 = sand.u32 %s165, 1
        %s340 = scalar_lea.sflag [#allocation5], %s339
        %s341 = sand.u32 %s165, 1
        %s342 = smul.addr %s341, 512
        %s343 = scalar_lea.vmem [#allocation10], %s342
        %s344 = smul.u32 16, %s27
        %s345 = smul.u32 4, %s28
        %s346 = smul.u32 4, %s28
        %s347 = smul.u32 16, %s27
        %s348 = smul.u32 4, %s28
        %p350 = scmp.eq.s32.totalorder %s28, 0
        // Predicated region
        $region57: #{tpu_custom_call.1} parent=39 // pred_check
          %p351 = pneg %p350
        $region58: #{tpu_custom_call.1} parent=39 // pred_check_branch
          %353 = sbr.rel (%p351) target = $region60
        $region59: #{tpu_custom_call.1} parent=39 // pred_region
          %v354 = vld [vmem:[%s285] sm:$0xff]
          %v355 = vld [vmem:[%s285 + $0x8] sm:$0xff]
          %v356 = vld [vmem:[%s285 + $0x10] sm:$0xff]
          %v357 = vld [vmem:[%s285 + $0x18] sm:$0xff]
          %v358 = vld [vmem:[%s285 + $0x20] sm:$0xff]
          %v359 = vld [vmem:[%s285 + $0x28] sm:$0xff]
          %v360 = vld [vmem:[%s285 + $0x30] sm:$0xff]
          %v361 = vld [vmem:[%s285 + $0x38] sm:$0xff]
          %v362 = vld [vmem:[%s285 + $0x40] sm:$0xff]
          %v363 = vld [vmem:[%s285 + $0x48] sm:$0xff]
          %v364 = vld [vmem:[%s285 + $0x50] sm:$0xff]
          %v365 = vld [vmem:[%s285 + $0x58] sm:$0xff]
          %v366 = vld [vmem:[%s285 + $0x60] sm:$0xff]
          %v367 = vld [vmem:[%s285 + $0x68] sm:$0xff]
          %v368 = vld [vmem:[%s285 + $0x70] sm:$0xff]
          %v369 = vld [vmem:[%s285 + $0x78] sm:$0xff]
          %v370 = vpack.c.bf16 %v355, %v354
          %v371 = vpack.c.bf16 %v357, %v356
          %v372 = vpack.c.bf16 %v359, %v358
          %v373 = vpack.c.bf16 %v361, %v360
          %v374 = vpack.c.bf16 %v363, %v362
          %v375 = vpack.c.bf16 %v365, %v364
          %v376 = vpack.c.bf16 %v367, %v366
          %v377 = vpack.c.bf16 %v369, %v368
          %v378 = vld [vmem:[#allocation6] sm:$0xff]
          %v379 = vld [vmem:[#allocation6 + $0x8] sm:$0xff]
          %v380 = vld [vmem:[#allocation6 + $0x10] sm:$0xff]
          %v381 = vld [vmem:[#allocation6 + $0x18] sm:$0xff]
          %v382 = vld [vmem:[#allocation6 + $0x20] sm:$0xff]
          %v383 = vld [vmem:[#allocation6 + $0x28] sm:$0xff]
          %v384 = vld [vmem:[#allocation6 + $0x30] sm:$0xff]
          %v385 = vld [vmem:[#allocation6 + $0x38] sm:$0xff]
          %v386 = vld [vmem:[#allocation6 + $0x40] sm:$0xff]
          %v387 = vld [vmem:[#allocation6 + $0x48] sm:$0xff]
          %v388 = vld [vmem:[#allocation6 + $0x50] sm:$0xff]
          %v389 = vld [vmem:[#allocation6 + $0x58] sm:$0xff]
          %v390 = vld [vmem:[#allocation6 + $0x60] sm:$0xff]
          %v391 = vld [vmem:[#allocation6 + $0x68] sm:$0xff]
          %v392 = vld [vmem:[#allocation6 + $0x70] sm:$0xff]
          %v393 = vld [vmem:[#allocation6 + $0x78] sm:$0xff]
          %v394 = vld [vmem:[%s2] sm:$0x3]
          %v396 = vlaneseq
          %v397 = vshrl.u32 %v396, 7
          %v398 = vsub.s32 0, %v397
          %v399 = vrot.slane %v394, %v398
          %v400 = vlaneseq
          %v401 = vshrl.u32 %v400, 7
          %v402 = vsub.s32 1, %v401
          %v403 = vrot.slane %v394, %v402
          %v422 = vunpack.c.l.b16 %v378
          %v423 = vunpack.c.h.b16 %v378
          %v424 = vunpack.c.l.b16 %v379
          %v425 = vunpack.c.h.b16 %v379
          %v426 = vunpack.c.l.b16 %v380
          %v427 = vunpack.c.h.b16 %v380
          %v428 = vunpack.c.l.b16 %v381
          %v429 = vunpack.c.h.b16 %v381
          %v430 = vunpack.c.l.b16 %v382
          %v431 = vunpack.c.h.b16 %v382
          %v432 = vunpack.c.l.b16 %v383
          %v433 = vunpack.c.h.b16 %v383
          %v434 = vunpack.c.l.b16 %v384
          %v435 = vunpack.c.h.b16 %v384
          %v436 = vunpack.c.l.b16 %v385
          %v437 = vunpack.c.h.b16 %v385
          %v438 = vunpack.c.l.b16 %v386
          %v439 = vunpack.c.h.b16 %v386
          %v440 = vunpack.c.l.b16 %v387
          %v441 = vunpack.c.h.b16 %v387
          %v442 = vunpack.c.l.b16 %v388
          %v443 = vunpack.c.h.b16 %v388
          %v444 = vunpack.c.l.b16 %v389
          %v445 = vunpack.c.h.b16 %v389
          %v446 = vunpack.c.l.b16 %v390
          %v447 = vunpack.c.h.b16 %v390
          %v448 = vunpack.c.l.b16 %v391
          %v449 = vunpack.c.h.b16 %v391
          %v450 = vunpack.c.l.b16 %v392
          %v451 = vunpack.c.h.b16 %v392
          %v452 = vunpack.c.l.b16 %v393
          %v453 = vunpack.c.h.b16 %v393
          %v454 = vpack.c.b16 %v424, %v422
          %v455 = vpack.c.b16 %v425, %v423
          %v456 = vpack.c.b16 %v428, %v426
          %v457 = vpack.c.b16 %v429, %v427
          %v458 = vpack.c.b16 %v432, %v430
          %v459 = vpack.c.b16 %v433, %v431
          %v460 = vpack.c.b16 %v436, %v434
          %v461 = vpack.c.b16 %v437, %v435
          %v462 = vpack.c.b16 %v440, %v438
          %v463 = vpack.c.b16 %v441, %v439
          %v464 = vpack.c.b16 %v444, %v442
          %v465 = vpack.c.b16 %v445, %v443
          %v466 = vpack.c.b16 %v448, %v446
          %v467 = vpack.c.b16 %v449, %v447
          %v468 = vpack.c.b16 %v452, %v450
          %v469 = vpack.c.b16 %v453, %v451
          %486 = vmatprep.subr.bf16.mxu0 %v469
          %487 = vmatpush1.bf16.msra.mxu0 %v468
          %488 = vmatprep.subr.bf16.mxu0 %v467
          %489 = vmatpush1.bf16.msra.mxu0 %v466
          %490 = vmatprep.subr.bf16.mxu0 %v465
          %491 = vmatpush1.bf16.msra.mxu0 %v464
          %492 = vmatprep.subr.bf16.mxu0 %v463
          %493 = vmatpush1.bf16.msra.mxu0 %v462
          %494 = vmatprep.subr.bf16.mxu0 %v461
          %495 = vmatpush1.bf16.msra.mxu0 %v460
          %496 = vmatprep.subr.bf16.mxu0 %v459
          %497 = vmatpush1.bf16.msra.mxu0 %v458
          %498 = vmatprep.subr.bf16.mxu0 %v457
          %499 = vmatpush1.bf16.msra.mxu0 %v456
          %500 = vmatprep.subr.bf16.mxu0 %v455
          %501 = vmatpush1.bf16.msra.mxu0 %v454
          %502 = vmatprep.subr.bf16.mxu0 0
          %503 = vmatpush2.bf16.msra.mxu0 0
          %504 = vmatprep.subr.bf16.mxu0 0
          %505 = vmatpush2.bf16.msra.mxu0 0
          %506 = vmatprep.subr.bf16.mxu0 0
          %507 = vmatpush2.bf16.msra.mxu0 0
          %508 = vmatprep.subr.bf16.mxu0 0
          %509 = vmatpush2.bf16.msra.mxu0 0
          %510 = vmatprep.subr.bf16.mxu0 0
          %511 = vmatpush2.bf16.msra.mxu0 0
          %512 = vmatprep.subr.bf16.mxu0 0
          %513 = vmatpush2.bf16.msra.mxu0 0
          %514 = vmatprep.subr.bf16.mxu0 0
          %515 = vmatpush2.bf16.msra.mxu0 0
          %516 = vmatprep.subr.bf16.mxu0 0
          %517 = vmatpush2.bf16.msra.mxu0 0
          %518 = vmatprep.mubr.bf16.mxu0 0
          %519 = vmatmul.mubr.bf16.gmra.mxu0 %v370
          %v520 = vpop.f32.mrf.mxu0
          %v521 = vadd.f32 %v399, %v520
          %v522 = vpop.f32.mrf.mxu0
          %v523 = vadd.f32 %v403, %v522
          %v524 = vpop.f32.mrf.mxu0
          %v525 = vadd.f32 %v399, %v524
          %v526 = vpop.f32.mrf.mxu0
          %v527 = vadd.f32 %v403, %v526
          %528 = vmatprep.mubr.bf16.mxu0 0
          %529 = vmatmul.mubr.bf16.gmra.mxu0 %v371
          %v530 = vpop.f32.mrf.mxu0
          %v531 = vadd.f32 %v399, %v530
          %v532 = vpop.f32.mrf.mxu0
          %v533 = vadd.f32 %v403, %v532
          %v534 = vpop.f32.mrf.mxu0
          %v535 = vadd.f32 %v399, %v534
          %v536 = vpop.f32.mrf.mxu0
          %v537 = vadd.f32 %v403, %v536
          %538 = vmatprep.mubr.bf16.mxu0 0
          %539 = vmatmul.mubr.bf16.gmra.mxu0 %v372
          %v540 = vpop.f32.mrf.mxu0
          %v541 = vadd.f32 %v399, %v540
          %v542 = vpop.f32.mrf.mxu0
          %v543 = vadd.f32 %v403, %v542
          %v544 = vpop.f32.mrf.mxu0
          %v545 = vadd.f32 %v399, %v544
          %v546 = vpop.f32.mrf.mxu0
          %v547 = vadd.f32 %v403, %v546
          %548 = vmatprep.mubr.bf16.mxu0 0
          %549 = vmatmul.mubr.bf16.gmra.mxu0 %v373
          %v550 = vpop.f32.mrf.mxu0
          %v551 = vadd.f32 %v399, %v550
          %v552 = vpop.f32.mrf.mxu0
          %v553 = vadd.f32 %v403, %v552
          %v554 = vpop.f32.mrf.mxu0
          %v555 = vadd.f32 %v399, %v554
          %v556 = vpop.f32.mrf.mxu0
          %v557 = vadd.f32 %v403, %v556
          %558 = vmatprep.mubr.bf16.mxu0 0
          %559 = vmatmul.mubr.bf16.gmra.mxu0 %v374
          %v560 = vpop.f32.mrf.mxu0
          %v561 = vadd.f32 %v399, %v560
          %v562 = vpop.f32.mrf.mxu0
          %v563 = vadd.f32 %v403, %v562
          %v564 = vpop.f32.mrf.mxu0
          %v565 = vadd.f32 %v399, %v564
          %v566 = vpop.f32.mrf.mxu0
          %v567 = vadd.f32 %v403, %v566
          %568 = vmatprep.mubr.bf16.mxu0 0
          %569 = vmatmul.mubr.bf16.gmra.mxu0 %v375
          %v570 = vpop.f32.mrf.mxu0
          %v571 = vadd.f32 %v399, %v570
          %v572 = vpop.f32.mrf.mxu0
          %v573 = vadd.f32 %v403, %v572
          %v574 = vpop.f32.mrf.mxu0
          %v575 = vadd.f32 %v399, %v574
          %v576 = vpop.f32.mrf.mxu0
          %v577 = vadd.f32 %v403, %v576
          %578 = vmatprep.mubr.bf16.mxu0 0
          %579 = vmatmul.mubr.bf16.gmra.mxu0 %v376
          %v580 = vpop.f32.mrf.mxu0
          %v581 = vadd.f32 %v399, %v580
          %v582 = vpop.f32.mrf.mxu0
          %v583 = vadd.f32 %v403, %v582
          %v584 = vpop.f32.mrf.mxu0
          %v585 = vadd.f32 %v399, %v584
          %v586 = vpop.f32.mrf.mxu0
          %v587 = vadd.f32 %v403, %v586
          %588 = vmatprep.mubr.bf16.mxu0 0
          %589 = vmatmul.mubr.bf16.gmra.mxu0 %v377
          %v590 = vpop.f32.mrf.mxu0
          %v591 = vadd.f32 %v399, %v590
          %v592 = vpop.f32.mrf.mxu0
          %v593 = vadd.f32 %v403, %v592
          %v594 = vpop.f32.mrf.mxu0
          %v595 = vadd.f32 %v399, %v594
          %v596 = vpop.f32.mrf.mxu0
          %v597 = vadd.f32 %v403, %v596
          %598 = vdwg.mxu0
          %v599 = vmul.f32 %v521, 0.01
          %v600 = vmul.f32 %v523, 0.01
          %v601 = vmul.f32 %v525, 0.01
          %v602 = vmul.f32 %v527, 0.01
          %v603 = vmul.f32 %v531, 0.01
          %v604 = vmul.f32 %v533, 0.01
          %v605 = vmul.f32 %v535, 0.01
          %v606 = vmul.f32 %v537, 0.01
          %v607 = vmul.f32 %v541, 0.01
          %v608 = vmul.f32 %v543, 0.01
          %v609 = vmul.f32 %v545, 0.01
          %v610 = vmul.f32 %v547, 0.01
          %v611 = vmul.f32 %v551, 0.01
          %v612 = vmul.f32 %v553, 0.01
          %v613 = vmul.f32 %v555, 0.01
          %v614 = vmul.f32 %v557, 0.01
          %v615 = vmul.f32 %v561, 0.01
          %v616 = vmul.f32 %v563, 0.01
          %v617 = vmul.f32 %v565, 0.01
          %v618 = vmul.f32 %v567, 0.01
          %v619 = vmul.f32 %v571, 0.01
          %v620 = vmul.f32 %v573, 0.01
          %v621 = vmul.f32 %v575, 0.01
          %v622 = vmul.f32 %v577, 0.01
          %v623 = vmul.f32 %v581, 0.01
          %v624 = vmul.f32 %v583, 0.01
          %v625 = vmul.f32 %v585, 0.01
          %v626 = vmul.f32 %v587, 0.01
          %v627 = vmul.f32 %v591, 0.01
          %v628 = vmul.f32 %v593, 0.01
          %v629 = vmul.f32 %v595, 0.01
          %v630 = vmul.f32 %v597, 0.01
          %v631 = vmax.f32 %v521, %v599
          %v632 = vmax.f32 %v523, %v600
          %v633 = vmax.f32 %v525, %v601
          %v634 = vmax.f32 %v527, %v602
          %v635 = vmax.f32 %v531, %v603
          %v636 = vmax.f32 %v533, %v604
          %v637 = vmax.f32 %v535, %v605
          %v638 = vmax.f32 %v537, %v606
          %v639 = vmax.f32 %v541, %v607
          %v640 = vmax.f32 %v543, %v608
          %v641 = vmax.f32 %v545, %v609
          %v642 = vmax.f32 %v547, %v610
          %v643 = vmax.f32 %v551, %v611
          %v644 = vmax.f32 %v553, %v612
          %v645 = vmax.f32 %v555, %v613
          %v646 = vmax.f32 %v557, %v614
          %v647 = vmax.f32 %v561, %v615
          %v648 = vmax.f32 %v563, %v616
          %v649 = vmax.f32 %v565, %v617
          %v650 = vmax.f32 %v567, %v618
          %v651 = vmax.f32 %v571, %v619
          %v652 = vmax.f32 %v573, %v620
          %v653 = vmax.f32 %v575, %v621
          %v654 = vmax.f32 %v577, %v622
          %v655 = vmax.f32 %v581, %v623
          %v656 = vmax.f32 %v583, %v624
          %v657 = vmax.f32 %v585, %v625
          %v658 = vmax.f32 %v587, %v626
          %v659 = vmax.f32 %v591, %v627
          %v660 = vmax.f32 %v593, %v628
          %v661 = vmax.f32 %v595, %v629
          %v662 = vmax.f32 %v597, %v630
          %v663 = vpack.c.bf16 %v633, %v631
          %v664 = vpack.c.bf16 %v634, %v632
          %v665 = vpack.c.bf16 %v637, %v635
          %v666 = vpack.c.bf16 %v638, %v636
          %v667 = vpack.c.bf16 %v641, %v639
          %v668 = vpack.c.bf16 %v642, %v640
          %v669 = vpack.c.bf16 %v645, %v643
          %v670 = vpack.c.bf16 %v646, %v644
          %v671 = vpack.c.bf16 %v649, %v647
          %v672 = vpack.c.bf16 %v650, %v648
          %v673 = vpack.c.bf16 %v653, %v651
          %v674 = vpack.c.bf16 %v654, %v652
          %v675 = vpack.c.bf16 %v657, %v655
          %v676 = vpack.c.bf16 %v658, %v656
          %v677 = vpack.c.bf16 %v661, %v659
          %v678 = vpack.c.bf16 %v662, %v660
          %v695 = vunpack.c.l.b16 %v663
          %v696 = vunpack.c.l.b16 %v664
          %v697 = vunpack.c.h.b16 %v663
          %v698 = vunpack.c.h.b16 %v664
          %v699 = vunpack.c.l.b16 %v665
          %v700 = vunpack.c.l.b16 %v666
          %v701 = vunpack.c.h.b16 %v665
          %v702 = vunpack.c.h.b16 %v666
          %v703 = vunpack.c.l.b16 %v667
          %v704 = vunpack.c.l.b16 %v668
          %v705 = vunpack.c.h.b16 %v667
          %v706 = vunpack.c.h.b16 %v668
          %v707 = vunpack.c.l.b16 %v669
          %v708 = vunpack.c.l.b16 %v670
          %v709 = vunpack.c.h.b16 %v669
          %v710 = vunpack.c.h.b16 %v670
          %v711 = vunpack.c.l.b16 %v671
          %v712 = vunpack.c.l.b16 %v672
          %v713 = vunpack.c.h.b16 %v671
          %v714 = vunpack.c.h.b16 %v672
          %v715 = vunpack.c.l.b16 %v673
          %v716 = vunpack.c.l.b16 %v674
          %v717 = vunpack.c.h.b16 %v673
          %v718 = vunpack.c.h.b16 %v674
          %v719 = vunpack.c.l.b16 %v675
          %v720 = vunpack.c.l.b16 %v676
          %v721 = vunpack.c.h.b16 %v675
          %v722 = vunpack.c.h.b16 %v676
          %v723 = vunpack.c.l.b16 %v677
          %v724 = vunpack.c.l.b16 %v678
          %v725 = vunpack.c.h.b16 %v677
          %v726 = vunpack.c.h.b16 %v678
          %v727 = vpack.c.b16 %v696, %v695
          %v728 = vpack.c.b16 %v698, %v697
          %v729 = vpack.c.b16 %v700, %v699
          %v730 = vpack.c.b16 %v702, %v701
          %v731 = vpack.c.b16 %v704, %v703
          %v732 = vpack.c.b16 %v706, %v705
          %v733 = vpack.c.b16 %v708, %v707
          %v734 = vpack.c.b16 %v710, %v709
          %v735 = vpack.c.b16 %v712, %v711
          %v736 = vpack.c.b16 %v714, %v713
          %v737 = vpack.c.b16 %v716, %v715
          %v738 = vpack.c.b16 %v718, %v717
          %v739 = vpack.c.b16 %v720, %v719
          %v740 = vpack.c.b16 %v722, %v721
          %v741 = vpack.c.b16 %v724, %v723
          %v742 = vpack.c.b16 %v726, %v725
          %759 = vst [vmem:[#allocation2] sm:$0xff] %v727
          %760 = vst [vmem:[#allocation2 + $0x8] sm:$0xff] %v728
          %761 = vst [vmem:[#allocation2 + $0x10] sm:$0xff] %v729
          %762 = vst [vmem:[#allocation2 + $0x18] sm:$0xff] %v730
          %763 = vst [vmem:[#allocation2 + $0x20] sm:$0xff] %v731
          %764 = vst [vmem:[#allocation2 + $0x28] sm:$0xff] %v732
          %765 = vst [vmem:[#allocation2 + $0x30] sm:$0xff] %v733
          %766 = vst [vmem:[#allocation2 + $0x38] sm:$0xff] %v734
          %767 = vst [vmem:[#allocation2 + $0x40] sm:$0xff] %v735
          %768 = vst [vmem:[#allocation2 + $0x48] sm:$0xff] %v736
          %769 = vst [vmem:[#allocation2 + $0x50] sm:$0xff] %v737
          %770 = vst [vmem:[#allocation2 + $0x58] sm:$0xff] %v738
          %771 = vst [vmem:[#allocation2 + $0x60] sm:$0xff] %v739
          %772 = vst [vmem:[#allocation2 + $0x68] sm:$0xff] %v740
          %773 = vst [vmem:[#allocation2 + $0x70] sm:$0xff] %v741
          %774 = vst [vmem:[#allocation2 + $0x78] sm:$0xff] %v742
        $region60: #{tpu_custom_call.1} parent=39 // pred_fallthru
          _
        %v775 = vld [vmem:[#allocation2] sm:$0xff]
        %v776 = vld [vmem:[#allocation2 + $0x8] sm:$0xff]
        %v777 = vld [vmem:[#allocation2 + $0x10] sm:$0xff]
        %v778 = vld [vmem:[#allocation2 + $0x18] sm:$0xff]
        %v779 = vld [vmem:[#allocation2 + $0x20] sm:$0xff]
        %v780 = vld [vmem:[#allocation2 + $0x28] sm:$0xff]
        %v781 = vld [vmem:[#allocation2 + $0x30] sm:$0xff]
        %v782 = vld [vmem:[#allocation2 + $0x38] sm:$0xff]
        %v783 = vld [vmem:[#allocation2 + $0x40] sm:$0xff]
        %v784 = vld [vmem:[#allocation2 + $0x48] sm:$0xff]
        %v785 = vld [vmem:[#allocation2 + $0x50] sm:$0xff]
        %v786 = vld [vmem:[#allocation2 + $0x58] sm:$0xff]
        %v787 = vld [vmem:[#allocation2 + $0x60] sm:$0xff]
        %v788 = vld [vmem:[#allocation2 + $0x68] sm:$0xff]
        %v789 = vld [vmem:[#allocation2 + $0x70] sm:$0xff]
        %v790 = vld [vmem:[#allocation2 + $0x78] sm:$0xff]
        %v791 = vld [vmem:[%s298] sm:$0xff]
        %v792 = vld [vmem:[%s298 + $0x8] sm:$0xff]
        %v793 = vld [vmem:[%s298 + $0x10] sm:$0xff]
        %v794 = vld [vmem:[%s298 + $0x18] sm:$0xff]
        %v795 = vld [vmem:[%s298 + $0x20] sm:$0xff]
        %v796 = vld [vmem:[%s298 + $0x28] sm:$0xff]
        %v797 = vld [vmem:[%s298 + $0x30] sm:$0xff]
        %v798 = vld [vmem:[%s298 + $0x38] sm:$0xff]
        %v799 = vld [vmem:[%s298 + $0x40] sm:$0xff]
        %v800 = vld [vmem:[%s298 + $0x48] sm:$0xff]
        %v801 = vld [vmem:[%s298 + $0x50] sm:$0xff]
        %v802 = vld [vmem:[%s298 + $0x58] sm:$0xff]
        %v803 = vld [vmem:[%s298 + $0x60] sm:$0xff]
        %v804 = vld [vmem:[%s298 + $0x68] sm:$0xff]
        %v805 = vld [vmem:[%s298 + $0x70] sm:$0xff]
        %v806 = vld [vmem:[%s298 + $0x78] sm:$0xff]
        %v807 = vld [vmem:[%s298 + $0x80] sm:$0xff]
        %v808 = vld [vmem:[%s298 + $0x88] sm:$0xff]
        %v809 = vld [vmem:[%s298 + $0x90] sm:$0xff]
        %v810 = vld [vmem:[%s298 + $0x98] sm:$0xff]
        %v811 = vld [vmem:[%s298 + $0xa0] sm:$0xff]
        %v812 = vld [vmem:[%s298 + $0xa8] sm:$0xff]
        %v813 = vld [vmem:[%s298 + $0xb0] sm:$0xff]
        %v814 = vld [vmem:[%s298 + $0xb8] sm:$0xff]
        %v815 = vld [vmem:[%s298 + $0xc0] sm:$0xff]
        %v816 = vld [vmem:[%s298 + $0xc8] sm:$0xff]
        %v817 = vld [vmem:[%s298 + $0xd0] sm:$0xff]
        %v818 = vld [vmem:[%s298 + $0xd8] sm:$0xff]
        %v819 = vld [vmem:[%s298 + $0xe0] sm:$0xff]
        %v820 = vld [vmem:[%s298 + $0xe8] sm:$0xff]
        %v821 = vld [vmem:[%s298 + $0xf0] sm:$0xff]
        %v822 = vld [vmem:[%s298 + $0xf8] sm:$0xff]
        %v823 = vld [vmem:[%s298 + $0x100] sm:$0xff]
        %v824 = vld [vmem:[%s298 + $0x108] sm:$0xff]
        %v825 = vld [vmem:[%s298 + $0x110] sm:$0xff]
        %v826 = vld [vmem:[%s298 + $0x118] sm:$0xff]
        %v827 = vld [vmem:[%s298 + $0x120] sm:$0xff]
        %v828 = vld [vmem:[%s298 + $0x128] sm:$0xff]
        %v829 = vld [vmem:[%s298 + $0x130] sm:$0xff]
        %v830 = vld [vmem:[%s298 + $0x138] sm:$0xff]
        %v831 = vld [vmem:[%s298 + $0x140] sm:$0xff]
        %v832 = vld [vmem:[%s298 + $0x148] sm:$0xff]
        %v833 = vld [vmem:[%s298 + $0x150] sm:$0xff]
        %v834 = vld [vmem:[%s298 + $0x158] sm:$0xff]
        %v835 = vld [vmem:[%s298 + $0x160] sm:$0xff]
        %v836 = vld [vmem:[%s298 + $0x168] sm:$0xff]
        %v837 = vld [vmem:[%s298 + $0x170] sm:$0xff]
        %v838 = vld [vmem:[%s298 + $0x178] sm:$0xff]
        %v839 = vld [vmem:[%s298 + $0x180] sm:$0xff]
        %v840 = vld [vmem:[%s298 + $0x188] sm:$0xff]
        %v841 = vld [vmem:[%s298 + $0x190] sm:$0xff]
        %v842 = vld [vmem:[%s298 + $0x198] sm:$0xff]
        %v843 = vld [vmem:[%s298 + $0x1a0] sm:$0xff]
        %v844 = vld [vmem:[%s298 + $0x1a8] sm:$0xff]
        %v845 = vld [vmem:[%s298 + $0x1b0] sm:$0xff]
        %v846 = vld [vmem:[%s298 + $0x1b8] sm:$0xff]
        %v847 = vld [vmem:[%s298 + $0x1c0] sm:$0xff]
        %v848 = vld [vmem:[%s298 + $0x1c8] sm:$0xff]
        %v849 = vld [vmem:[%s298 + $0x1d0] sm:$0xff]
        %v850 = vld [vmem:[%s298 + $0x1d8] sm:$0xff]
        %v851 = vld [vmem:[%s298 + $0x1e0] sm:$0xff]
        %v852 = vld [vmem:[%s298 + $0x1e8] sm:$0xff]
        %v853 = vld [vmem:[%s298 + $0x1f0] sm:$0xff]
        %v854 = vld [vmem:[%s298 + $0x1f8] sm:$0xff]
        %v855 = vld [vmem:[%s307] sm:$0xf]
        %v857 = vlaneseq
        %v858 = vshrl.u32 %v857, 7
        %v859 = vsub.s32 0, %v858
        %v860 = vrot.slane %v855, %v859
        %v861 = vlaneseq
        %v862 = vshrl.u32 %v861, 7
        %v863 = vsub.s32 1, %v862
        %v864 = vrot.slane %v855, %v863
        %v865 = vlaneseq
        %v866 = vshrl.u32 %v865, 7
        %v867 = vsub.s32 2, %v866
        %v868 = vrot.slane %v855, %v867
        %v869 = vlaneseq
        %v870 = vshrl.u32 %v869, 7
        %v871 = vsub.s32 3, %v870
        %v872 = vrot.slane %v855, %v871
        %v893 = vunpack.c.l.b16 %v775
        %v894 = vunpack.c.h.b16 %v775
        %v895 = vunpack.c.l.b16 %v776
        %v896 = vunpack.c.h.b16 %v776
        %v897 = vunpack.c.l.b16 %v777
        %v898 = vunpack.c.h.b16 %v777
        %v899 = vunpack.c.l.b16 %v778
        %v900 = vunpack.c.h.b16 %v778
        %v901 = vunpack.c.l.b16 %v779
        %v902 = vunpack.c.h.b16 %v779
        %v903 = vunpack.c.l.b16 %v780
        %v904 = vunpack.c.h.b16 %v780
        %v905 = vunpack.c.l.b16 %v781
        %v906 = vunpack.c.h.b16 %v781
        %v907 = vunpack.c.l.b16 %v782
        %v908 = vunpack.c.h.b16 %v782
        %v909 = vunpack.c.l.b16 %v783
        %v910 = vunpack.c.h.b16 %v783
        %v911 = vunpack.c.l.b16 %v784
        %v912 = vunpack.c.h.b16 %v784
        %v913 = vunpack.c.l.b16 %v785
        %v914 = vunpack.c.h.b16 %v785
        %v915 = vunpack.c.l.b16 %v786
        %v916 = vunpack.c.h.b16 %v786
        %v917 = vunpack.c.l.b16 %v787
        %v918 = vunpack.c.h.b16 %v787
        %v919 = vunpack.c.l.b16 %v788
        %v920 = vunpack.c.h.b16 %v788
        %v921 = vunpack.c.l.b16 %v789
        %v922 = vunpack.c.h.b16 %v789
        %v923 = vunpack.c.l.b16 %v790
        %v924 = vunpack.c.h.b16 %v790
        %v925 = vpack.c.b16 %v895, %v893
        %v926 = vpack.c.b16 %v896, %v894
        %v927 = vpack.c.b16 %v899, %v897
        %v928 = vpack.c.b16 %v900, %v898
        %v929 = vpack.c.b16 %v903, %v901
        %v930 = vpack.c.b16 %v904, %v902
        %v931 = vpack.c.b16 %v907, %v905
        %v932 = vpack.c.b16 %v908, %v906
        %v933 = vpack.c.b16 %v911, %v909
        %v934 = vpack.c.b16 %v912, %v910
        %v935 = vpack.c.b16 %v915, %v913
        %v936 = vpack.c.b16 %v916, %v914
        %v937 = vpack.c.b16 %v919, %v917
        %v938 = vpack.c.b16 %v920, %v918
        %v939 = vpack.c.b16 %v923, %v921
        %v940 = vpack.c.b16 %v924, %v922
        %v1021 = vunpack.c.l.b16 %v791
        %v1022 = vunpack.c.h.b16 %v791
        %v1023 = vunpack.c.l.b16 %v792
        %v1024 = vunpack.c.h.b16 %v792
        %v1025 = vunpack.c.l.b16 %v793
        %v1026 = vunpack.c.h.b16 %v793
        %v1027 = vunpack.c.l.b16 %v794
        %v1028 = vunpack.c.h.b16 %v794
        %v1029 = vunpack.c.l.b16 %v795
        %v1030 = vunpack.c.h.b16 %v795
        %v1031 = vunpack.c.l.b16 %v796
        %v1032 = vunpack.c.h.b16 %v796
        %v1033 = vunpack.c.l.b16 %v797
        %v1034 = vunpack.c.h.b16 %v797
        %v1035 = vunpack.c.l.b16 %v798
        %v1036 = vunpack.c.h.b16 %v798
        %v1037 = vunpack.c.l.b16 %v799
        %v1038 = vunpack.c.h.b16 %v799
        %v1039 = vunpack.c.l.b16 %v800
        %v1040 = vunpack.c.h.b16 %v800
        %v1041 = vunpack.c.l.b16 %v801
        %v1042 = vunpack.c.h.b16 %v801
        %v1043 = vunpack.c.l.b16 %v802
        %v1044 = vunpack.c.h.b16 %v802
        %v1045 = vunpack.c.l.b16 %v803
        %v1046 = vunpack.c.h.b16 %v803
        %v1047 = vunpack.c.l.b16 %v804
        %v1048 = vunpack.c.h.b16 %v804
        %v1049 = vunpack.c.l.b16 %v805
        %v1050 = vunpack.c.h.b16 %v805
        %v1051 = vunpack.c.l.b16 %v806
        %v1052 = vunpack.c.h.b16 %v806
        %v1053 = vunpack.c.l.b16 %v807
        %v1054 = vunpack.c.h.b16 %v807
        %v1055 = vunpack.c.l.b16 %v808
        %v1056 = vunpack.c.h.b16 %v808
        %v1057 = vunpack.c.l.b16 %v809
        %v1058 = vunpack.c.h.b16 %v809
        %v1059 = vunpack.c.l.b16 %v810
        %v1060 = vunpack.c.h.b16 %v810
        %v1061 = vunpack.c.l.b16 %v811
        %v1062 = vunpack.c.h.b16 %v811
        %v1063 = vunpack.c.l.b16 %v812
        %v1064 = vunpack.c.h.b16 %v812
        %v1065 = vunpack.c.l.b16 %v813
        %v1066 = vunpack.c.h.b16 %v813
        %v1067 = vunpack.c.l.b16 %v814
        %v1068 = vunpack.c.h.b16 %v814
        %v1069 = vunpack.c.l.b16 %v815
        %v1070 = vunpack.c.h.b16 %v815
        %v1071 = vunpack.c.l.b16 %v816
        %v1072 = vunpack.c.h.b16 %v816
        %v1073 = vunpack.c.l.b16 %v817
        %v1074 = vunpack.c.h.b16 %v817
        %v1075 = vunpack.c.l.b16 %v818
        %v1076 = vunpack.c.h.b16 %v818
        %v1077 = vunpack.c.l.b16 %v819
        %v1078 = vunpack.c.h.b16 %v819
        %v1079 = vunpack.c.l.b16 %v820
        %v1080 = vunpack.c.h.b16 %v820
        %v1081 = vunpack.c.l.b16 %v821
        %v1082 = vunpack.c.h.b16 %v821
        %v1083 = vunpack.c.l.b16 %v822
        %v1084 = vunpack.c.h.b16 %v822
        %v1085 = vunpack.c.l.b16 %v823
        %v1086 = vunpack.c.h.b16 %v823
        %v1087 = vunpack.c.l.b16 %v824
        %v1088 = vunpack.c.h.b16 %v824
        %v1089 = vunpack.c.l.b16 %v825
        %v1090 = vunpack.c.h.b16 %v825
        %v1091 = vunpack.c.l.b16 %v826
        %v1092 = vunpack.c.h.b16 %v826
        %v1093 = vunpack.c.l.b16 %v827
        %v1094 = vunpack.c.h.b16 %v827
        %v1095 = vunpack.c.l.b16 %v828
        %v1096 = vunpack.c.h.b16 %v828
        %v1097 = vunpack.c.l.b16 %v829
        %v1098 = vunpack.c.h.b16 %v829
        %v1099 = vunpack.c.l.b16 %v830
        %v1100 = vunpack.c.h.b16 %v830
        %v1101 = vunpack.c.l.b16 %v831
        %v1102 = vunpack.c.h.b16 %v831
        %v1103 = vunpack.c.l.b16 %v832
        %v1104 = vunpack.c.h.b16 %v832
        %v1105 = vunpack.c.l.b16 %v833
        %v1106 = vunpack.c.h.b16 %v833
        %v1107 = vunpack.c.l.b16 %v834
        %v1108 = vunpack.c.h.b16 %v834
        %v1109 = vunpack.c.l.b16 %v835
        %v1110 = vunpack.c.h.b16 %v835
        %v1111 = vunpack.c.l.b16 %v836
        %v1112 = vunpack.c.h.b16 %v836
        %v1113 = vunpack.c.l.b16 %v837
        %v1114 = vunpack.c.h.b16 %v837
        %v1115 = vunpack.c.l.b16 %v838
        %v1116 = vunpack.c.h.b16 %v838
        %v1117 = vunpack.c.l.b16 %v839
        %v1118 = vunpack.c.h.b16 %v839
        %v1119 = vunpack.c.l.b16 %v840
        %v1120 = vunpack.c.h.b16 %v840
        %v1121 = vunpack.c.l.b16 %v841
        %v1122 = vunpack.c.h.b16 %v841
        %v1123 = vunpack.c.l.b16 %v842
        %v1124 = vunpack.c.h.b16 %v842
        %v1125 = vunpack.c.l.b16 %v843
        %v1126 = vunpack.c.h.b16 %v843
        %v1127 = vunpack.c.l.b16 %v844
        %v1128 = vunpack.c.h.b16 %v844
        %v1129 = vunpack.c.l.b16 %v845
        %v1130 = vunpack.c.h.b16 %v845
        %v1131 = vunpack.c.l.b16 %v846
        %v1132 = vunpack.c.h.b16 %v846
        %v1133 = vunpack.c.l.b16 %v847
        %v1134 = vunpack.c.h.b16 %v847
        %v1135 = vunpack.c.l.b16 %v848
        %v1136 = vunpack.c.h.b16 %v848
        %v1137 = vunpack.c.l.b16 %v849
        %v1138 = vunpack.c.h.b16 %v849
        %v1139 = vunpack.c.l.b16 %v850
        %v1140 = vunpack.c.h.b16 %v850
        %v1141 = vunpack.c.l.b16 %v851
        %v1142 = vunpack.c.h.b16 %v851
        %v1143 = vunpack.c.l.b16 %v852
        %v1144 = vunpack.c.h.b16 %v852
        %v1145 = vunpack.c.l.b16 %v853
        %v1146 = vunpack.c.h.b16 %v853
        %v1147 = vunpack.c.l.b16 %v854
        %v1148 = vunpack.c.h.b16 %v854
        %v1149 = vpack.c.b16 %v1025, %v1021
        %v1150 = vpack.c.b16 %v1026, %v1022
        %v1151 = vpack.c.b16 %v1027, %v1023
        %v1152 = vpack.c.b16 %v1028, %v1024
        %v1153 = vpack.c.b16 %v1033, %v1029
        %v1154 = vpack.c.b16 %v1034, %v1030
        %v1155 = vpack.c.b16 %v1035, %v1031
        %v1156 = vpack.c.b16 %v1036, %v1032
        %v1157 = vpack.c.b16 %v1041, %v1037
        %v1158 = vpack.c.b16 %v1042, %v1038
        %v1159 = vpack.c.b16 %v1043, %v1039
        %v1160 = vpack.c.b16 %v1044, %v1040
        %v1161 = vpack.c.b16 %v1049, %v1045
        %v1162 = vpack.c.b16 %v1050, %v1046
        %v1163 = vpack.c.b16 %v1051, %v1047
        %v1164 = vpack.c.b16 %v1052, %v1048
        %v1165 = vpack.c.b16 %v1057, %v1053
        %v1166 = vpack.c.b16 %v1058, %v1054
        %v1167 = vpack.c.b16 %v1059, %v1055
        %v1168 = vpack.c.b16 %v1060, %v1056
        %v1169 = vpack.c.b16 %v1065, %v1061
        %v1170 = vpack.c.b16 %v1066, %v1062
        %v1171 = vpack.c.b16 %v1067, %v1063
        %v1172 = vpack.c.b16 %v1068, %v1064
        %v1173 = vpack.c.b16 %v1073, %v1069
        %v1174 = vpack.c.b16 %v1074, %v1070
        %v1175 = vpack.c.b16 %v1075, %v1071
        %v1176 = vpack.c.b16 %v1076, %v1072
        %v1177 = vpack.c.b16 %v1081, %v1077
        %v1178 = vpack.c.b16 %v1082, %v1078
        %v1179 = vpack.c.b16 %v1083, %v1079
        %v1180 = vpack.c.b16 %v1084, %v1080
        %v1181 = vpack.c.b16 %v1089, %v1085
        %v1182 = vpack.c.b16 %v1090, %v1086
        %v1183 = vpack.c.b16 %v1091, %v1087
        %v1184 = vpack.c.b16 %v1092, %v1088
        %v1185 = vpack.c.b16 %v1097, %v1093
        %v1186 = vpack.c.b16 %v1098, %v1094
        %v1187 = vpack.c.b16 %v1099, %v1095
        %v1188 = vpack.c.b16 %v1100, %v1096
        %v1189 = vpack.c.b16 %v1105, %v1101
        %v1190 = vpack.c.b16 %v1106, %v1102
        %v1191 = vpack.c.b16 %v1107, %v1103
        %v1192 = vpack.c.b16 %v1108, %v1104
        %v1193 = vpack.c.b16 %v1113, %v1109
        %v1194 = vpack.c.b16 %v1114, %v1110
        %v1195 = vpack.c.b16 %v1115, %v1111
        %v1196 = vpack.c.b16 %v1116, %v1112
        %v1197 = vpack.c.b16 %v1121, %v1117
        %v1198 = vpack.c.b16 %v1122, %v1118
        %v1199 = vpack.c.b16 %v1123, %v1119
        %v1200 = vpack.c.b16 %v1124, %v1120
        %v1201 = vpack.c.b16 %v1129, %v1125
        %v1202 = vpack.c.b16 %v1130, %v1126
        %v1203 = vpack.c.b16 %v1131, %v1127
        %v1204 = vpack.c.b16 %v1132, %v1128
        %v1205 = vpack.c.b16 %v1137, %v1133
        %v1206 = vpack.c.b16 %v1138, %v1134
        %v1207 = vpack.c.b16 %v1139, %v1135
        %v1208 = vpack.c.b16 %v1140, %v1136
        %v1209 = vpack.c.b16 %v1145, %v1141
        %v1210 = vpack.c.b16 %v1146, %v1142
        %v1211 = vpack.c.b16 %v1147, %v1143
        %v1212 = vpack.c.b16 %v1148, %v1144
        %1277 = vmatprep.subr.bf16.mxu0 %v1178
        %1278 = vmatpush1.bf16.msra.mxu0 %v1177
        %1279 = vmatprep.subr.bf16.mxu0 %v1174
        %1280 = vmatpush1.bf16.msra.mxu0 %v1173
        %1281 = vmatprep.subr.bf16.mxu0 %v1170
        %1282 = vmatpush1.bf16.msra.mxu0 %v1169
        %1283 = vmatprep.subr.bf16.mxu0 %v1166
        %1284 = vmatpush1.bf16.msra.mxu0 %v1165
        %1285 = vmatprep.subr.bf16.mxu0 %v1162
        %1286 = vmatpush1.bf16.msra.mxu0 %v1161
        %1287 = vmatprep.subr.bf16.mxu0 %v1158
        %1288 = vmatpush1.bf16.msra.mxu0 %v1157
        %1289 = vmatprep.subr.bf16.mxu0 %v1154
        %1290 = vmatpush1.bf16.msra.mxu0 %v1153
        %1291 = vmatprep.subr.bf16.mxu0 %v1150
        %1292 = vmatpush1.bf16.msra.mxu0 %v1149
        %1293 = vmatprep.subr.bf16.mxu0 %v1210
        %1294 = vmatpush2.bf16.msra.mxu0 %v1209
        %1295 = vmatprep.subr.bf16.mxu0 %v1206
        %1296 = vmatpush2.bf16.msra.mxu0 %v1205
        %1297 = vmatprep.subr.bf16.mxu0 %v1202
        %1298 = vmatpush2.bf16.msra.mxu0 %v1201
        %1299 = vmatprep.subr.bf16.mxu0 %v1198
        %1300 = vmatpush2.bf16.msra.mxu0 %v1197
        %1301 = vmatprep.subr.bf16.mxu0 %v1194
        %1302 = vmatpush2.bf16.msra.mxu0 %v1193
        %1303 = vmatprep.subr.bf16.mxu0 %v1190
        %1304 = vmatpush2.bf16.msra.mxu0 %v1189
        %1305 = vmatprep.subr.bf16.mxu0 %v1186
        %1306 = vmatpush2.bf16.msra.mxu0 %v1185
        %1307 = vmatprep.subr.bf16.mxu0 %v1182
        %1308 = vmatpush2.bf16.msra.mxu0 %v1181
        %1309 = vmatprep.mubr.bf16.mxu0 %v926
        %1310 = vmatmul.mubr.bf16.gmra.mxu0 %v925
        %v1311 = vpop.f32.mrf.mxu0
        %v1312 = vadd.f32 %v860, %v1311
        %v1313 = vpop.f32.mrf.mxu0
        %v1314 = vadd.f32 %v864, %v1313
        %v1315 = vpop.f32.mrf.mxu0
        %v1316 = vadd.f32 %v860, %v1315
        %v1317 = vpop.f32.mrf.mxu0
        %v1318 = vadd.f32 %v864, %v1317
        %1319 = vmatprep.mubr.bf16.mxu0 %v928
        %1320 = vmatmul.mubr.bf16.gmra.mxu0 %v927
        %v1321 = vpop.f32.mrf.mxu0
        %v1322 = vadd.f32 %v860, %v1321
        %v1323 = vpop.f32.mrf.mxu0
        %v1324 = vadd.f32 %v864, %v1323
        %v1325 = vpop.f32.mrf.mxu0
        %v1326 = vadd.f32 %v860, %v1325
        %v1327 = vpop.f32.mrf.mxu0
        %v1328 = vadd.f32 %v864, %v1327
        %1329 = vmatprep.mubr.bf16.mxu0 %v930
        %1330 = vmatmul.mubr.bf16.gmra.mxu0 %v929
        %v1331 = vpop.f32.mrf.mxu0
        %v1332 = vadd.f32 %v860, %v1331
        %v1333 = vpop.f32.mrf.mxu0
        %v1334 = vadd.f32 %v864, %v1333
        %v1335 = vpop.f32.mrf.mxu0
        %v1336 = vadd.f32 %v860, %v1335
        %v1337 = vpop.f32.mrf.mxu0
        %v1338 = vadd.f32 %v864, %v1337
        %1339 = vmatprep.mubr.bf16.mxu0 %v932
        %1340 = vmatmul.mubr.bf16.gmra.mxu0 %v931
        %v1341 = vpop.f32.mrf.mxu0
        %v1342 = vadd.f32 %v860, %v1341
        %v1343 = vpop.f32.mrf.mxu0
        %v1344 = vadd.f32 %v864, %v1343
        %v1345 = vpop.f32.mrf.mxu0
        %v1346 = vadd.f32 %v860, %v1345
        %v1347 = vpop.f32.mrf.mxu0
        %v1348 = vadd.f32 %v864, %v1347
        %1349 = vmatprep.mubr.bf16.mxu0 %v934
        %1350 = vmatmul.mubr.bf16.gmra.mxu0 %v933
        %v1351 = vpop.f32.mrf.mxu0
        %v1352 = vadd.f32 %v860, %v1351
        %v1353 = vpop.f32.mrf.mxu0
        %v1354 = vadd.f32 %v864, %v1353
        %v1355 = vpop.f32.mrf.mxu0
        %v1356 = vadd.f32 %v860, %v1355
        %v1357 = vpop.f32.mrf.mxu0
        %v1358 = vadd.f32 %v864, %v1357
        %1359 = vmatprep.mubr.bf16.mxu0 %v936
        %1360 = vmatmul.mubr.bf16.gmra.mxu0 %v935
        %v1361 = vpop.f32.mrf.mxu0
        %v1362 = vadd.f32 %v860, %v1361
        %v1363 = vpop.f32.mrf.mxu0
        %v1364 = vadd.f32 %v864, %v1363
        %v1365 = vpop.f32.mrf.mxu0
        %v1366 = vadd.f32 %v860, %v1365
        %v1367 = vpop.f32.mrf.mxu0
        %v1368 = vadd.f32 %v864, %v1367
        %1369 = vmatprep.mubr.bf16.mxu0 %v938
        %1370 = vmatmul.mubr.bf16.gmra.mxu0 %v937
        %v1371 = vpop.f32.mrf.mxu0
        %v1372 = vadd.f32 %v860, %v1371
        %v1373 = vpop.f32.mrf.mxu0
        %v1374 = vadd.f32 %v864, %v1373
        %v1375 = vpop.f32.mrf.mxu0
        %v1376 = vadd.f32 %v860, %v1375
        %v1377 = vpop.f32.mrf.mxu0
        %v1378 = vadd.f32 %v864, %v1377
        %1379 = vmatprep.mubr.bf16.mxu0 %v940
        %1380 = vmatmul.mubr.bf16.gmra.mxu0 %v939
        %v1381 = vpop.f32.mrf.mxu0
        %v1382 = vadd.f32 %v860, %v1381
        %v1383 = vpop.f32.mrf.mxu0
        %v1384 = vadd.f32 %v864, %v1383
        %v1385 = vpop.f32.mrf.mxu0
        %v1386 = vadd.f32 %v860, %v1385
        %v1387 = vpop.f32.mrf.mxu0
        %v1388 = vadd.f32 %v864, %v1387
        %1389 = vdwg.mxu0
        %1390 = vmatprep.subr.bf16.mxu0 %v1180
        %1391 = vmatpush1.bf16.msra.mxu0 %v1179
        %1392 = vmatprep.subr.bf16.mxu0 %v1176
        %1393 = vmatpush1.bf16.msra.mxu0 %v1175
        %1394 = vmatprep.subr.bf16.mxu0 %v1172
        %1395 = vmatpush1.bf16.msra.mxu0 %v1171
        %1396 = vmatprep.subr.bf16.mxu0 %v1168
        %1397 = vmatpush1.bf16.msra.mxu0 %v1167
        %1398 = vmatprep.subr.bf16.mxu0 %v1164
        %1399 = vmatpush1.bf16.msra.mxu0 %v1163
        %1400 = vmatprep.subr.bf16.mxu0 %v1160
        %1401 = vmatpush1.bf16.msra.mxu0 %v1159
        %1402 = vmatprep.subr.bf16.mxu0 %v1156
        %1403 = vmatpush1.bf16.msra.mxu0 %v1155
        %1404 = vmatprep.subr.bf16.mxu0 %v1152
        %1405 = vmatpush1.bf16.msra.mxu0 %v1151
        %1406 = vmatprep.subr.bf16.mxu0 %v1212
        %1407 = vmatpush2.bf16.msra.mxu0 %v1211
        %1408 = vmatprep.subr.bf16.mxu0 %v1208
        %1409 = vmatpush2.bf16.msra.mxu0 %v1207
        %1410 = vmatprep.subr.bf16.mxu0 %v1204
        %1411 = vmatpush2.bf16.msra.mxu0 %v1203
        %1412 = vmatprep.subr.bf16.mxu0 %v1200
        %1413 = vmatpush2.bf16.msra.mxu0 %v1199
        %1414 = vmatprep.subr.bf16.mxu0 %v1196
        %1415 = vmatpush2.bf16.msra.mxu0 %v1195
        %1416 = vmatprep.subr.bf16.mxu0 %v1192
        %1417 = vmatpush2.bf16.msra.mxu0 %v1191
        %1418 = vmatprep.subr.bf16.mxu0 %v1188
        %1419 = vmatpush2.bf16.msra.mxu0 %v1187
        %1420 = vmatprep.subr.bf16.mxu0 %v1184
        %1421 = vmatpush2.bf16.msra.mxu0 %v1183
        %1422 = vmatprep.mubr.bf16.mxu0 %v926
        %1423 = vmatmul.mubr.bf16.gmra.mxu0 %v925
        %v1424 = vpop.f32.mrf.mxu0
        %v1425 = vadd.f32 %v868, %v1424
        %v1426 = vpop.f32.mrf.mxu0
        %v1427 = vadd.f32 %v872, %v1426
        %v1428 = vpop.f32.mrf.mxu0
        %v1429 = vadd.f32 %v868, %v1428
        %v1430 = vpop.f32.mrf.mxu0
        %v1431 = vadd.f32 %v872, %v1430
        %1432 = vmatprep.mubr.bf16.mxu0 %v928
        %1433 = vmatmul.mubr.bf16.gmra.mxu0 %v927
        %v1434 = vpop.f32.mrf.mxu0
        %v1435 = vadd.f32 %v868, %v1434
        %v1436 = vpop.f32.mrf.mxu0
        %v1437 = vadd.f32 %v872, %v1436
        %v1438 = vpop.f32.mrf.mxu0
        %v1439 = vadd.f32 %v868, %v1438
        %v1440 = vpop.f32.mrf.mxu0
        %v1441 = vadd.f32 %v872, %v1440
        %1442 = vmatprep.mubr.bf16.mxu0 %v930
        %1443 = vmatmul.mubr.bf16.gmra.mxu0 %v929
        %v1444 = vpop.f32.mrf.mxu0
        %v1445 = vadd.f32 %v868, %v1444
        %v1446 = vpop.f32.mrf.mxu0
        %v1447 = vadd.f32 %v872, %v1446
        %v1448 = vpop.f32.mrf.mxu0
        %v1449 = vadd.f32 %v868, %v1448
        %v1450 = vpop.f32.mrf.mxu0
        %v1451 = vadd.f32 %v872, %v1450
        %1452 = vmatprep.mubr.bf16.mxu0 %v932
        %1453 = vmatmul.mubr.bf16.gmra.mxu0 %v931
        %v1454 = vpop.f32.mrf.mxu0
        %v1455 = vadd.f32 %v868, %v1454
        %v1456 = vpop.f32.mrf.mxu0
        %v1457 = vadd.f32 %v872, %v1456
        %v1458 = vpop.f32.mrf.mxu0
        %v1459 = vadd.f32 %v868, %v1458
        %v1460 = vpop.f32.mrf.mxu0
        %v1461 = vadd.f32 %v872, %v1460
        %1462 = vmatprep.mubr.bf16.mxu0 %v934
        %1463 = vmatmul.mubr.bf16.gmra.mxu0 %v933
        %v1464 = vpop.f32.mrf.mxu0
        %v1465 = vadd.f32 %v868, %v1464
        %v1466 = vpop.f32.mrf.mxu0
        %v1467 = vadd.f32 %v872, %v1466
        %v1468 = vpop.f32.mrf.mxu0
        %v1469 = vadd.f32 %v868, %v1468
        %v1470 = vpop.f32.mrf.mxu0
        %v1471 = vadd.f32 %v872, %v1470
        %1472 = vmatprep.mubr.bf16.mxu0 %v936
        %1473 = vmatmul.mubr.bf16.gmra.mxu0 %v935
        %v1474 = vpop.f32.mrf.mxu0
        %v1475 = vadd.f32 %v868, %v1474
        %v1476 = vpop.f32.mrf.mxu0
        %v1477 = vadd.f32 %v872, %v1476
        %v1478 = vpop.f32.mrf.mxu0
        %v1479 = vadd.f32 %v868, %v1478
        %v1480 = vpop.f32.mrf.mxu0
        %v1481 = vadd.f32 %v872, %v1480
        %1482 = vmatprep.mubr.bf16.mxu0 %v938
        %1483 = vmatmul.mubr.bf16.gmra.mxu0 %v937
        %v1484 = vpop.f32.mrf.mxu0
        %v1485 = vadd.f32 %v868, %v1484
        %v1486 = vpop.f32.mrf.mxu0
        %v1487 = vadd.f32 %v872, %v1486
        %v1488 = vpop.f32.mrf.mxu0
        %v1489 = vadd.f32 %v868, %v1488
        %v1490 = vpop.f32.mrf.mxu0
        %v1491 = vadd.f32 %v872, %v1490
        %1492 = vmatprep.mubr.bf16.mxu0 %v940
        %1493 = vmatmul.mubr.bf16.gmra.mxu0 %v939
        %v1494 = vpop.f32.mrf.mxu0
        %v1495 = vadd.f32 %v868, %v1494
        %v1496 = vpop.f32.mrf.mxu0
        %v1497 = vadd.f32 %v872, %v1496
        %v1498 = vpop.f32.mrf.mxu0
        %v1499 = vadd.f32 %v868, %v1498
        %v1500 = vpop.f32.mrf.mxu0
        %v1501 = vadd.f32 %v872, %v1500
        %1502 = vdwg.mxu0
        %1503 = vst [vmem:[%s343] sm:$0xff] %v1312
        %1504 = vst [vmem:[%s343 + $0x8] sm:$0xff] %v1314
        %1505 = vst [vmem:[%s343 + $0x10] sm:$0xff] %v1425
        %1506 = vst [vmem:[%s343 + $0x18] sm:$0xff] %v1427
        %1507 = vst [vmem:[%s343 + $0x20] sm:$0xff] %v1316
        %1508 = vst [vmem:[%s343 + $0x28] sm:$0xff] %v1318
        %1509 = vst [vmem:[%s343 + $0x30] sm:$0xff] %v1429
        %1510 = vst [vmem:[%s343 + $0x38] sm:$0xff] %v1431
        %1511 = vst [vmem:[%s343 + $0x40] sm:$0xff] %v1322
        %1512 = vst [vmem:[%s343 + $0x48] sm:$0xff] %v1324
        %1513 = vst [vmem:[%s343 + $0x50] sm:$0xff] %v1435
        %1514 = vst [vmem:[%s343 + $0x58] sm:$0xff] %v1437
        %1515 = vst [vmem:[%s343 + $0x60] sm:$0xff] %v1326
        %1516 = vst [vmem:[%s343 + $0x68] sm:$0xff] %v1328
        %1517 = vst [vmem:[%s343 + $0x70] sm:$0xff] %v1439
        %1518 = vst [vmem:[%s343 + $0x78] sm:$0xff] %v1441
        %1519 = vst [vmem:[%s343 + $0x80] sm:$0xff] %v1332
        %1520 = vst [vmem:[%s343 + $0x88] sm:$0xff] %v1334
        %1521 = vst [vmem:[%s343 + $0x90] sm:$0xff] %v1445
        %1522 = vst [vmem:[%s343 + $0x98] sm:$0xff] %v1447
        %1523 = vst [vmem:[%s343 + $0xa0] sm:$0xff] %v1336
        %1524 = vst [vmem:[%s343 + $0xa8] sm:$0xff] %v1338
        %1525 = vst [vmem:[%s343 + $0xb0] sm:$0xff] %v1449
        %1526 = vst [vmem:[%s343 + $0xb8] sm:$0xff] %v1451
        %1527 = vst [vmem:[%s343 + $0xc0] sm:$0xff] %v1342
        %1528 = vst [vmem:[%s343 + $0xc8] sm:$0xff] %v1344
        %1529 = vst [vmem:[%s343 + $0xd0] sm:$0xff] %v1455
        %1530 = vst [vmem:[%s343 + $0xd8] sm:$0xff] %v1457
        %1531 = vst [vmem:[%s343 + $0xe0] sm:$0xff] %v1346
        %1532 = vst [vmem:[%s343 + $0xe8] sm:$0xff] %v1348
        %1533 = vst [vmem:[%s343 + $0xf0] sm:$0xff] %v1459
        %1534 = vst [vmem:[%s343 + $0xf8] sm:$0xff] %v1461
        %1535 = vst [vmem:[%s343 + $0x100] sm:$0xff] %v1352
        %1536 = vst [vmem:[%s343 + $0x108] sm:$0xff] %v1354
        %1537 = vst [vmem:[%s343 + $0x110] sm:$0xff] %v1465
        %1538 = vst [vmem:[%s343 + $0x118] sm:$0xff] %v1467
        %1539 = vst [vmem:[%s343 + $0x120] sm:$0xff] %v1356
        %1540 = vst [vmem:[%s343 + $0x128] sm:$0xff] %v1358
        %1541 = vst [vmem:[%s343 + $0x130] sm:$0xff] %v1469
        %1542 = vst [vmem:[%s343 + $0x138] sm:$0xff] %v1471
        %1543 = vst [vmem:[%s343 + $0x140] sm:$0xff] %v1362
        %1544 = vst [vmem:[%s343 + $0x148] sm:$0xff] %v1364
        %1545 = vst [vmem:[%s343 + $0x150] sm:$0xff] %v1475
        %1546 = vst [vmem:[%s343 + $0x158] sm:$0xff] %v1477
        %1547 = vst [vmem:[%s343 + $0x160] sm:$0xff] %v1366
        %1548 = vst [vmem:[%s343 + $0x168] sm:$0xff] %v1368
        %1549 = vst [vmem:[%s343 + $0x170] sm:$0xff] %v1479
        %1550 = vst [vmem:[%s343 + $0x178] sm:$0xff] %v1481
        %1551 = vst [vmem:[%s343 + $0x180] sm:$0xff] %v1372
        %1552 = vst [vmem:[%s343 + $0x188] sm:$0xff] %v1374
        %1553 = vst [vmem:[%s343 + $0x190] sm:$0xff] %v1485
        %1554 = vst [vmem:[%s343 + $0x198] sm:$0xff] %v1487
        %1555 = vst [vmem:[%s343 + $0x1a0] sm:$0xff] %v1376
        %1556 = vst [vmem:[%s343 + $0x1a8] sm:$0xff] %v1378
        %1557 = vst [vmem:[%s343 + $0x1b0] sm:$0xff] %v1489
        %1558 = vst [vmem:[%s343 + $0x1b8] sm:$0xff] %v1491
        %1559 = vst [vmem:[%s343 + $0x1c0] sm:$0xff] %v1382
        %1560 = vst [vmem:[%s343 + $0x1c8] sm:$0xff] %v1384
        %1561 = vst [vmem:[%s343 + $0x1d0] sm:$0xff] %v1495
        %1562 = vst [vmem:[%s343 + $0x1d8] sm:$0xff] %v1497
        %1563 = vst [vmem:[%s343 + $0x1e0] sm:$0xff] %v1386
        %1564 = vst [vmem:[%s343 + $0x1e8] sm:$0xff] %v1388
        %1565 = vst [vmem:[%s343 + $0x1f0] sm:$0xff] %v1499
        %1566 = vst [vmem:[%s343 + $0x1f8] sm:$0xff] %v1501
        %s1567 = sand.u32 %s165, 1
        %s1568 = scalar_lea.sflag [#allocation5], %s1567
        %s1569 = sand.u32 %s165, 1
        %s1570 = smul.addr %s1569, 512
        %s1571 = scalar_lea.vmem [#allocation10], %s1570
        // Predicated region
        $region61: #{tpu_custom_call.1} parent=39 // pred_check
          %p1572 = pneg %p175
        $region62: #{tpu_custom_call.1} parent=39 // pred_check_branch
          %1574 = sbr.rel (%p1572) target = $region64
        $region63: #{tpu_custom_call.1} parent=39 // pred_region
          %s1575 = smul.u32 16, %s27
          %s1576 = smul.u32 4, %s28
          %s1578 = ssub.s32 8192, 8192
          %1579 = vsyncadd %s1568, %s1578
          %s1580 = smul.addr %s1575, 8
          %s1581 = sadd.s32 %s1576, %s1580
          %s1582 = smul.addr %s1581, 128
          %s1583 = scalar_lea.hbm %s5, %s1582
          %s1584 = sshll.u32 %s1571, 4
          %s1585 = int_to_ptr.vmem [resolvable:$true] %s1584
          %1590 = dma.vmem_to_hbm [thread:$0]  %s1585, 8192, %s1583, %s1568, 512, 1024, 32
        $region64: #{tpu_custom_call.1} parent=39 // pred_fallthru
          _
      $region40: #{tpu_custom_call.1} parent=5 // pred_fallthru
        _
      %p1591 = scmp.le.s32.totalorder 2, %s18
      // Predicated region
      $region65: #{tpu_custom_call.1} parent=5 // pred_check
        %p1592 = pneg %p1591
      $region66: #{tpu_custom_call.1} parent=5 // pred_check_branch
        %1594 = sbr.rel (%p1592) target = $region68
      $region67: #{tpu_custom_call.1} parent=5 // pred_region
        %s1595 = ssub.s32 %s18, 2
        // Predicated region
        $region69: #{tpu_custom_call.1} parent=67 // pred_check
          %p1596 = pneg %p181
        $region70: #{tpu_custom_call.1} parent=67 // pred_check_branch
          %1598 = sbr.rel (%p1596) target = $region72
        $region71: #{tpu_custom_call.1} parent=67 // pred_region
          %s1599 = sand.u32 %s166, 1
          %s1600 = scalar_lea.sflag [#allocation5], %s1599
          %s1601 = sand.u32 %s166, 1
          %s1602 = smul.addr %s1601, 512
          %s1603 = scalar_lea.vmem [#allocation10], %s1602
          %1604 = dma.done %s1600, 8192
        $region72: #{tpu_custom_call.1} parent=67 // pred_fallthru
          _
      $region68: #{tpu_custom_call.1} parent=5 // pred_fallthru
        _
    $region6: #{tpu_custom_call.1} parent=1 // loop_footer
      %s22 = sadd.s32 1, %s18
    $region7: #{tpu_custom_call.1} parent=1 // loop_footer_branch
      %17 = sbr.rel target = $region3
    $region8: #{tpu_custom_call.1} parent=1 // loop_exit
      _
    %1605 = vsyncpa [#allocation4], 1
    %s1606 = scalar_lea.sflag [#allocation4], 1
    %1607 = vsyncpa %s1606, 1
    %1608 = vsyncpa [#allocation7], 1
    %1609 = vsyncpa [#allocation5], 1
    %s1610 = scalar_lea.sflag [#allocation5], 1
    %1611 = vsyncpa %s1610, 1

</llo_original>
